<compile_context>
chip_gen: v7x
topology: tpu7x:2x2x1
jax: 0.10.0
libtpu: 0.0.40
codegen_flags: <defaults>
</compile_context>

<pallas_src>
import jax
import jax.numpy as jnp
from jax import lax
from jax.experimental import pallas as pl
from jax.experimental.pallas import tpu as pltpu

_EPS = 1e-5          # nn.BatchNorm2d default
_LANE = 128


# ------------------------------ small helpers --------------------------------

def _round_up(x, m):
    return ((x + m - 1) // m) * m


def _fold_bn(gamma, beta, mean, var):
    scale = gamma / jnp.sqrt(var + _EPS)
    bias = beta - mean * scale
    return scale, bias                                            # (Co,), (Co,)


def _phase_decompose(x_nhwc, stride, pad, kp, dtype):
    """Pad + stride-phase split + channel pad + flatten, emitted in bf16.

    Returns (phases, Ho, Wo, Wg, R): `stride*stride` arrays of shape (N, R, kp)
    where tap (ky,kx) of a 3x3 conv reads phases[(ky%s)*s + kx%s] at flat row
    offset (ky//s)*Wg + kx//s with window length Ho*Wg.  Output columns
    wo >= Wo on the padded-width grid are garbage and sliced off by the caller.
    """
    N, H, W, C = x_nhwc.shape
    k = 3
    Ho = (H + 2 * pad - k) // stride + 1
    Wo = (W + 2 * pad - k) // stride + 1
    H2 = _round_up(H + 2 * pad, stride)
    W2 = _round_up(W + 2 * pad, stride)
    xp = jnp.pad(x_nhwc, ((0, 0), (pad, H2 - H - pad),
                          (pad, W2 - W - pad), (0, kp - C))).astype(dtype)
    Hs, Ws = H2 // stride, W2 // stride
    phases = []
    for py in range(stride):
        for px in range(stride):
            ph = xp[:, py::stride, px::stride, :]                 # (N,Hs,Ws,kp)
            ph = jnp.pad(ph, ((0, 0), (0, 1), (0, 0), (0, 0)))    # guard row
            phases.append(ph.reshape(N, (Hs + 1) * Ws, kp))
    return phases, Ho, Wo, Ws, (Hs + 1) * Ws


def _to_grid(a_nhwc, wg, cpad, dtype):
    """(N, Ho, Wo, C) -> (N, Ho*wg, cpad) bf16: zero-pad width/channels, flatten."""
    N, Ho, Wo, C = a_nhwc.shape
    a = jnp.pad(a_nhwc, ((0, 0), (0, 0), (0, wg - Wo), (0, cpad - C)))
    return a.reshape(N, Ho * wg, cpad).astype(dtype)


# ------------------------------ Pallas kernel ---------------------------------

def _make_conv_kernel(stride, taps, rows, cop, mode):
    """9-tap conv + folded-BN bias + (residual | 1x1 projection) + ReLU."""
    nph = stride * stride

    def kernel(*refs):
        ph_refs = refs[:nph]
        w_ref, b_ref = refs[nph], refs[nph + 1]
        rest = refs[nph + 2:]
        if mode == "proj":
            xs_ref, ws_ref, bs_ref, o_ref = rest
        elif mode == "res":
            res_ref, o_ref = rest
        else:
            (o_ref,) = rest

        acc = jnp.zeros((rows, cop), jnp.float32)
        # Static 9-tap reduction: shifted VMEM windows -> MXU, f32 accumulate.
        for t, (p_idx, off) in enumerate(taps):
            win = ph_refs[p_idx][pl.ds(off, rows), :]             # (rows,kp) bf16
            acc = acc + jnp.dot(win, w_ref[t],
                                preferred_element_type=jnp.float32)
        h = acc + b_ref[...]
        if mode == "proj":          # fused 1x1-conv + BN projection shortcut
            h = h + jnp.dot(xs_ref[...], ws_ref[...],
                            preferred_element_type=jnp.float32) + bs_ref[...]
        elif mode == "res":         # identity shortcut: bf16 residual add
            h = h + res_ref[...].astype(jnp.float32)
        o_ref[...] = jnp.maximum(h, 0.0).astype(o_ref.dtype)

    return kernel


# ------------------------------ call wrapper ----------------------------------

def _conv3x3_bn_relu(x_nhwc, w_oihw, gamma, beta, mean, var, stride,
                     residual=None, shortcut=None, out_dtype=jnp.float32):
    """relu(BN(conv3x3(x)) [+ residual | + BN(conv1x1(xs))]) as one pallas_call.

    Returns (out_grid, Ho, Wo) with out_grid (N, Ho, Wg, Cop); caller slices
    [:, :, :Wo, :Cout].
    """
    N, H, W, Cin = x_nhwc.shape
    Cout = w_oihw.shape[0]
    k, pad = 3, 1
    kp = _round_up(Cin, _LANE)       # MXU/lane-aligned contraction dim
    cop = _round_up(Cout, _LANE)     # lane-dense output channels

    # Fold inference BatchNorm scale/bias into the conv weight taps.
    scale, bias = _fold_bn(gamma, beta, mean, var)
    w_taps = jnp.transpose(w_oihw, (2, 3, 1, 0)).reshape(k * k, Cin, Cout) * scale
    w_taps = jnp.pad(w_taps, ((0, 0), (0, kp - Cin),
                              (0, cop - Cout))).astype(jnp.bfloat16)   # (9,kp,cop)
    b = jnp.pad(bias, (0, cop - Cout)).reshape(1, cop).astype(jnp.float32)

    phases, Ho, Wo, wg, R = _phase_decompose(x_nhwc, stride, pad, kp,
                                             jnp.bfloat16)
    rows = Ho * wg
    taps = [((ky % stride) * stride + kx % stride,
             (ky // stride) * wg + kx // stride)
            for ky in range(k) for kx in range(k)]

    ph_spec = pl.BlockSpec((None, R, kp), lambda n: (n, 0, 0))
    w_spec = pl.BlockSpec((k * k, kp, cop), lambda n: (0, 0, 0))   # resident W
    b_spec = pl.BlockSpec((1, cop), lambda n: (0, 0))              # resident b
    o_spec = pl.BlockSpec((None, rows, cop), lambda n: (n, 0, 0))

    operands = list(phases) + [w_taps, b]
    in_specs = [ph_spec] * len(phases) + [w_spec, b_spec]
    flops = 2 * N * rows * kp * cop * (k * k)
    bytes_accessed = (sum(int(p.size) for p in phases) * 2 + w_taps.size * 2
                      + b.size * 4
                      + N * rows * cop * jnp.dtype(out_dtype).itemsize)

    if shortcut is not None:
        xs_nhwc, ws, bs = shortcut                       # projection shortcut
        ksp = _round_up(xs_nhwc.shape[-1], _LANE)
        xs = _to_grid(xs_nhwc, wg, ksp, jnp.bfloat16)            # (N, rows, ksp)
        ws_p = jnp.pad(ws, ((0, ksp - ws.shape[0]),
                            (0, cop - ws.shape[1]))).astype(jnp.bfloat16)
        bs_p = jnp.pad(bs, (0, cop - bs.shape[0])).reshape(1, cop).astype(jnp.float32)
        operands += [xs, ws_p, bs_p]
        in_specs += [pl.BlockSpec((None, rows, ksp), lambda n: (n, 0, 0)),
                     pl.BlockSpec((ksp, cop), lambda n: (0, 0)),
                     b_spec]
        mode = "proj"
        flops += 2 * N * rows * ksp * cop
        bytes_accessed += xs.size * 2 + ws_p.size * 2 + bs_p.size * 4
    elif residual is not None:
        res = _to_grid(residual, wg, cop, jnp.bfloat16)          # bf16 residual
        operands += [res]
        in_specs += [pl.BlockSpec((None, rows, cop), lambda n: (n, 0, 0))]
        mode = "res"
        bytes_accessed += res.size * 2
    else:
        mode = "plain"

    kernel = _make_conv_kernel(stride, taps, rows, cop, mode)
    out = pl.pallas_call(
        kernel,
        grid=(N,),
        in_specs=in_specs,
        out_specs=o_spec,
        out_shape=jax.ShapeDtypeStruct((N, rows, cop), out_dtype),
        compiler_params=pltpu.CompilerParams(
            dimension_semantics=("parallel",),
            vmem_limit_bytes=48 * 1024 * 1024),
        cost_estimate=pl.CostEstimate(
            flops=int(flops), transcendentals=0,
            bytes_accessed=int(bytes_accessed)),
    )(*operands)
    return out.reshape(N, Ho, wg, cop), Ho, Wo


# ------------------------------- block forward --------------------------------

def basic_block_forward(x_nchw, params, stride):
    """Full BasicBlock forward.  x_nchw: (N, Cin, H, W) -> (N, P, Ho, Wo)."""
    x = jnp.transpose(x_nchw, (0, 2, 3, 1)).astype(jnp.float32)   # NHWC
    N, H, W, Cin = x.shape
    P = params["conv1_w"].shape[0]

    # conv1 + bn1 + relu : bf16 intermediate (halves its HBM round trip).
    h1g, Ho, Wo = _conv3x3_bn_relu(
        x, params["conv1_w"], params["bn1_g"], params["bn1_b"],
        params["bn1_m"], params["bn1_v"], stride, out_dtype=jnp.bfloat16)
    h1 = h1g[:, :, :Wo, :P]            # fused with conv2's pad/phase-build pass

    # conv2 + bn2 + shortcut + add + relu, all fused in one kernel epilogue.
    if stride != 1 or Cin != P:
        ss, bs = _fold_bn(params["sc_g"], params["sc_b"],
                          params["sc_m"], params["sc_v"])
        ws = params["sc_w"].reshape(P, Cin).T * ss                # (Cin, P)
        xs = x[:, ::stride, ::stride, :]                          # (N,Ho,Wo,Cin)
        outg, _, _ = _conv3x3_bn_relu(
            h1, params["conv2_w"], params["bn2_g"], params["bn2_b"],
            params["bn2_m"], params["bn2_v"], 1,
            shortcut=(xs, ws, bs), out_dtype=jnp.float32)
    else:
        outg, _, _ = _conv3x3_bn_relu(
            h1, params["conv2_w"], params["bn2_g"], params["bn2_b"],
            params["bn2_m"], params["bn2_v"], 1,
            residual=x, out_dtype=jnp.float32)

    out = outg[:, :, :Wo, :P]                                     # (N,Ho,Wo,P)
    return jnp.transpose(out, (0, 3, 1, 2))                       # back to NCHW


# ----------------------------- reference (JAX) --------------------------------

def _ref_forward(x_nchw, params, stride):
    x = jnp.transpose(x_nchw, (0, 2, 3, 1)).astype(jnp.float32)

    def conv(x, w_oihw, s, pad):
        w = jnp.transpose(w_oihw, (2, 3, 1, 0))  # HWIO
        return lax.conv_general_dilated(
            x, w, (s, s), [(pad, pad), (pad, pad)],
            dimension_numbers=("NHWC", "HWIO", "NHWC"))

    def bn(x, g, b, m, v):
        return (x - m) * (g / jnp.sqrt(v + _EPS)) + b

    out = jax.nn.relu(bn(conv(x, params["conv1_w"], stride, 1),
                         params["bn1_g"], params["bn1_b"],
                         params["bn1_m"], params["bn1_v"]))
    out = bn(conv(out, params["conv2_w"], 1, 1),
             params["bn2_g"], params["bn2_b"], params["bn2_m"], params["bn2_v"])
    Cin = x.shape[-1]
    P = params["conv1_w"].shape[0]
    if stride != 1 or Cin != P:
        sc = bn(conv(x, params["sc_w"], stride, 0),
                params["sc_g"], params["sc_b"], params["sc_m"], params["sc_v"])
    else:
        sc = x
    out = jax.nn.relu(out + sc)
    return jnp.transpose(out, (0, 3, 1, 2))


# ------------------------------- main ------------------------------------------

def _init_params(key, in_planes, planes, stride):
    ks = jax.random.split(key, 16)
    p = {
        "conv1_w": jax.random.normal(ks[0], (planes, in_planes, 3, 3), jnp.float32) * 0.1,
        "bn1_g": jax.random.uniform(ks[1], (planes,), jnp.float32, 0.5, 1.5),
        "bn1_b": jax.random.normal(ks[2], (planes,), jnp.float32) * 0.1,
        "bn1_m": jax.random.normal(ks[3], (planes,), jnp.float32) * 0.1,
        "bn1_v": jax.random.uniform(ks[4], (planes,), jnp.float32, 0.5, 1.5),
        "conv2_w": jax.random.normal(ks[5], (planes, planes, 3, 3), jnp.float32) * 0.1,
        "bn2_g": jax.random.uniform(ks[6], (planes,), jnp.float32, 0.5, 1.5),
        "bn2_b": jax.random.normal(ks[7], (planes,), jnp.float32) * 0.1,
        "bn2_m": jax.random.normal(ks[8], (planes,), jnp.float32) * 0.1,
        "bn2_v": jax.random.uniform(ks[9], (planes,), jnp.float32, 0.5, 1.5),
    }
    if stride != 1 or in_planes != planes:
        p.update({
            "sc_w": jax.random.normal(ks[10], (planes, in_planes, 1, 1), jnp.float32) * 0.1,
            "sc_g": jax.random.uniform(ks[11], (planes,), jnp.float32, 0.5, 1.5),
            "sc_b": jax.random.normal(ks[12], (planes,), jnp.float32) * 0.1,
            "sc_m": jax.random.normal(ks[13], (planes,), jnp.float32) * 0.1,
            "sc_v": jax.random.uniform(ks[14], (planes,), jnp.float32, 0.5, 1.5),
        })
    return p


if __name__ == "__main__":
    key = jax.random.PRNGKey(0)
    kx, kp1, kp2 = jax.random.split(key, 3)

    # Case 1: projection shortcut (stride=2, channel change).
    in_planes, planes, stride = 4, 8, 2
    x = jax.random.normal(kx, (2, in_planes, 16, 16), jnp.float32)  # NCHW
    params = _init_params(kp1, in_planes, planes, stride)
    out = jax.block_until_ready(basic_block_forward(x, params, stride))
    ref = jax.block_until_ready(_ref_forward(x, params, stride))
    assert out.shape == ref.shape == (2, planes, 8, 8)
    # bf16 MXU inputs (f32 accumulation) -> relaxed tolerance vs f32 reference.
    assert jnp.allclose(out, ref, atol=3e-2, rtol=3e-2), "mismatch (projection)"

    # Case 2: identity shortcut (stride=1, same channels) -> fused residual add.
    params_id = _init_params(kp2, planes, planes, 1)
    x2 = ref  # reuse previous output as input (2, 8, 8, 8)
    out2 = jax.block_until_ready(basic_block_forward(x2, params_id, 1))
    ref2 = jax.block_until_ready(_ref_forward(x2, params_id, 1))
    assert out2.shape == ref2.shape == (2, planes, 8, 8)
    assert jnp.allclose(out2, ref2, atol=3e-2, rtol=3e-2), "mismatch (identity)"

    print("KERNEL_OK")
</pallas_src>

<mosaic_0001>
module attributes {stable_mosaic.version = 11 : i64} {
  func.func @kernel(%arg0: i32, %arg1: memref<1x90x128xbf16, #tpu.memory_space<vmem>>, %arg2: memref<1x90x128xbf16, #tpu.memory_space<vmem>>, %arg3: memref<1x90x128xbf16, #tpu.memory_space<vmem>>, %arg4: memref<1x90x128xbf16, #tpu.memory_space<vmem>>, %arg5: memref<9x128x128xbf16, #tpu.memory_space<vmem>>, %arg6: memref<1x128xf32, #tpu.memory_space<vmem>>, %arg7: memref<1x72x128xbf16, #tpu.memory_space<vmem>>) attributes {dimension_semantics = [#tpu.dimension_semantics<parallel>], iteration_bounds = array<i64: 2>, scalar_prefetch = 0 : i64, scratch_operands = 0 : i64, tpu.core_type = #tpu.core_type<tc>, window_params = [{transform_indices = @transform_0, window_bounds = array<i64: 1, 90, 128>}, {transform_indices = @transform_1, window_bounds = array<i64: 1, 90, 128>}, {transform_indices = @transform_2, window_bounds = array<i64: 1, 90, 128>}, {transform_indices = @transform_3, window_bounds = array<i64: 1, 90, 128>}, {pipeline_mode = #tpu.pipeline_mode<synchronous>, transform_indices = @transform_4, window_bounds = array<i64: 9, 128, 128>}, {pipeline_mode = #tpu.pipeline_mode<synchronous>, transform_indices = @transform_5, window_bounds = array<i64: 1, 128>}, {transform_indices = @transform_6, window_bounds = array<i64: 1, 72, 128>}]} {
    %cst = arith.constant 0.000000e+00 : f32
    %0 = vector.broadcast %cst : f32 to vector<72x128xf32>
    %c0 = arith.constant 0 : index
    %c0_0 = arith.constant 0 : index
    %c0_1 = arith.constant 0 : index
    %1 = vector.load %arg1[%c0, %c0_0, %c0_1] : memref<1x90x128xbf16, #tpu.memory_space<vmem>>, vector<1x72x128xbf16>
    %2 = vector.shape_cast %1 : vector<1x72x128xbf16> to vector<72x128xbf16>
    %c0_2 = arith.constant 0 : index
    %c0_3 = arith.constant 0 : index
    %c0_4 = arith.constant 0 : index
    %3 = vector.load %arg5[%c0_2, %c0_3, %c0_4] : memref<9x128x128xbf16, #tpu.memory_space<vmem>>, vector<1x128x128xbf16>
    %4 = vector.shape_cast %3 : vector<1x128x128xbf16> to vector<128x128xbf16>
    %cst_5 = arith.constant dense<0.000000e+00> : vector<72x128xf32>
    %5 = tpu.matmul %2, %4, %cst_5 {dimension_numbers = #tpu.dot_dimension_numbers<[1], [0], [0], [1], [0, 0, 1, 1], [], []>} : vector<72x128xbf16>, vector<128x128xbf16>, vector<72x128xf32> -> vector<72x128xf32>
    %6 = arith.addf %0, %5 : vector<72x128xf32>
    %c0_6 = arith.constant 0 : index
    %c0_7 = arith.constant 0 : index
    %c0_8 = arith.constant 0 : index
    %7 = vector.load %arg2[%c0_6, %c0_7, %c0_8] : memref<1x90x128xbf16, #tpu.memory_space<vmem>>, vector<1x72x128xbf16>
    %8 = vector.shape_cast %7 : vector<1x72x128xbf16> to vector<72x128xbf16>
    %c1 = arith.constant 1 : index
    %c0_9 = arith.constant 0 : index
    %c0_10 = arith.constant 0 : index
    %9 = vector.load %arg5[%c1, %c0_9, %c0_10] : memref<9x128x128xbf16, #tpu.memory_space<vmem>>, vector<1x128x128xbf16>
    %10 = vector.shape_cast %9 : vector<1x128x128xbf16> to vector<128x128xbf16>
    %cst_11 = arith.constant dense<0.000000e+00> : vector<72x128xf32>
    %11 = tpu.matmul %8, %10, %cst_11 {dimension_numbers = #tpu.dot_dimension_numbers<[1], [0], [0], [1], [0, 0, 1, 1], [], []>} : vector<72x128xbf16>, vector<128x128xbf16>, vector<72x128xf32> -> vector<72x128xf32>
    %12 = arith.addf %6, %11 : vector<72x128xf32>
    %c0_12 = arith.constant 0 : index
    %c1_13 = arith.constant 1 : index
    %c0_14 = arith.constant 0 : index
    %13 = vector.load %arg1[%c0_12, %c1_13, %c0_14] : memref<1x90x128xbf16, #tpu.memory_space<vmem>>, vector<1x72x128xbf16>
    %14 = vector.shape_cast %13 : vector<1x72x128xbf16> to vector<72x128xbf16>
    %c2 = arith.constant 2 : index
    %c0_15 = arith.constant 0 : index
    %c0_16 = arith.constant 0 : index
    %15 = vector.load %arg5[%c2, %c0_15, %c0_16] : memref<9x128x128xbf16, #tpu.memory_space<vmem>>, vector<1x128x128xbf16>
    %16 = vector.shape_cast %15 : vector<1x128x128xbf16> to vector<128x128xbf16>
    %cst_17 = arith.constant dense<0.000000e+00> : vector<72x128xf32>
    %17 = tpu.matmul %14, %16, %cst_17 {dimension_numbers = #tpu.dot_dimension_numbers<[1], [0], [0], [1], [0, 0, 1, 1], [], []>} : vector<72x128xbf16>, vector<128x128xbf16>, vector<72x128xf32> -> vector<72x128xf32>
    %18 = arith.addf %12, %17 : vector<72x128xf32>
    %c0_18 = arith.constant 0 : index
    %c0_19 = arith.constant 0 : index
    %c0_20 = arith.constant 0 : index
    %19 = vector.load %arg3[%c0_18, %c0_19, %c0_20] : memref<1x90x128xbf16, #tpu.memory_space<vmem>>, vector<1x72x128xbf16>
    %20 = vector.shape_cast %19 : vector<1x72x128xbf16> to vector<72x128xbf16>
    %c3 = arith.constant 3 : index
    %c0_21 = arith.constant 0 : index
    %c0_22 = arith.constant 0 : index
    %21 = vector.load %arg5[%c3, %c0_21, %c0_22] : memref<9x128x128xbf16, #tpu.memory_space<vmem>>, vector<1x128x128xbf16>
    %22 = vector.shape_cast %21 : vector<1x128x128xbf16> to vector<128x128xbf16>
    %cst_23 = arith.constant dense<0.000000e+00> : vector<72x128xf32>
    %23 = tpu.matmul %20, %22, %cst_23 {dimension_numbers = #tpu.dot_dimension_numbers<[1], [0], [0], [1], [0, 0, 1, 1], [], []>} : vector<72x128xbf16>, vector<128x128xbf16>, vector<72x128xf32> -> vector<72x128xf32>
    %24 = arith.addf %18, %23 : vector<72x128xf32>
    %c0_24 = arith.constant 0 : index
    %c0_25 = arith.constant 0 : index
    %c0_26 = arith.constant 0 : index
    %25 = vector.load %arg4[%c0_24, %c0_25, %c0_26] : memref<1x90x128xbf16, #tpu.memory_space<vmem>>, vector<1x72x128xbf16>
    %26 = vector.shape_cast %25 : vector<1x72x128xbf16> to vector<72x128xbf16>
    %c4 = arith.constant 4 : index
    %c0_27 = arith.constant 0 : index
    %c0_28 = arith.constant 0 : index
    %27 = vector.load %arg5[%c4, %c0_27, %c0_28] : memref<9x128x128xbf16, #tpu.memory_space<vmem>>, vector<1x128x128xbf16>
    %28 = vector.shape_cast %27 : vector<1x128x128xbf16> to vector<128x128xbf16>
    %cst_29 = arith.constant dense<0.000000e+00> : vector<72x128xf32>
    %29 = tpu.matmul %26, %28, %cst_29 {dimension_numbers = #tpu.dot_dimension_numbers<[1], [0], [0], [1], [0, 0, 1, 1], [], []>} : vector<72x128xbf16>, vector<128x128xbf16>, vector<72x128xf32> -> vector<72x128xf32>
    %30 = arith.addf %24, %29 : vector<72x128xf32>
    %c0_30 = arith.constant 0 : index
    %c1_31 = arith.constant 1 : index
    %c0_32 = arith.constant 0 : index
    %31 = vector.load %arg3[%c0_30, %c1_31, %c0_32] : memref<1x90x128xbf16, #tpu.memory_space<vmem>>, vector<1x72x128xbf16>
    %32 = vector.shape_cast %31 : vector<1x72x128xbf16> to vector<72x128xbf16>
    %c5 = arith.constant 5 : index
    %c0_33 = arith.constant 0 : index
    %c0_34 = arith.constant 0 : index
    %33 = vector.load %arg5[%c5, %c0_33, %c0_34] : memref<9x128x128xbf16, #tpu.memory_space<vmem>>, vector<1x128x128xbf16>
    %34 = vector.shape_cast %33 : vector<1x128x128xbf16> to vector<128x128xbf16>
    %cst_35 = arith.constant dense<0.000000e+00> : vector<72x128xf32>
    %35 = tpu.matmul %32, %34, %cst_35 {dimension_numbers = #tpu.dot_dimension_numbers<[1], [0], [0], [1], [0, 0, 1, 1], [], []>} : vector<72x128xbf16>, vector<128x128xbf16>, vector<72x128xf32> -> vector<72x128xf32>
    %36 = arith.addf %30, %35 : vector<72x128xf32>
    %c0_36 = arith.constant 0 : index
    %c9 = arith.constant 9 : index
    %c0_37 = arith.constant 0 : index
    %37 = vector.load %arg1[%c0_36, %c9, %c0_37] : memref<1x90x128xbf16, #tpu.memory_space<vmem>>, vector<1x72x128xbf16>
    %38 = vector.shape_cast %37 : vector<1x72x128xbf16> to vector<72x128xbf16>
    %c6 = arith.constant 6 : index
    %c0_38 = arith.constant 0 : index
    %c0_39 = arith.constant 0 : index
    %39 = vector.load %arg5[%c6, %c0_38, %c0_39] : memref<9x128x128xbf16, #tpu.memory_space<vmem>>, vector<1x128x128xbf16>
    %40 = vector.shape_cast %39 : vector<1x128x128xbf16> to vector<128x128xbf16>
    %cst_40 = arith.constant dense<0.000000e+00> : vector<72x128xf32>
    %41 = tpu.matmul %38, %40, %cst_40 {dimension_numbers = #tpu.dot_dimension_numbers<[1], [0], [0], [1], [0, 0, 1, 1], [], []>} : vector<72x128xbf16>, vector<128x128xbf16>, vector<72x128xf32> -> vector<72x128xf32>
    %42 = arith.addf %36, %41 : vector<72x128xf32>
    %c0_41 = arith.constant 0 : index
    %c9_42 = arith.constant 9 : index
    %c0_43 = arith.constant 0 : index
    %43 = vector.load %arg2[%c0_41, %c9_42, %c0_43] : memref<1x90x128xbf16, #tpu.memory_space<vmem>>, vector<1x72x128xbf16>
    %44 = vector.shape_cast %43 : vector<1x72x128xbf16> to vector<72x128xbf16>
    %c7 = arith.constant 7 : index
    %c0_44 = arith.constant 0 : index
    %c0_45 = arith.constant 0 : index
    %45 = vector.load %arg5[%c7, %c0_44, %c0_45] : memref<9x128x128xbf16, #tpu.memory_space<vmem>>, vector<1x128x128xbf16>
    %46 = vector.shape_cast %45 : vector<1x128x128xbf16> to vector<128x128xbf16>
    %cst_46 = arith.constant dense<0.000000e+00> : vector<72x128xf32>
    %47 = tpu.matmul %44, %46, %cst_46 {dimension_numbers = #tpu.dot_dimension_numbers<[1], [0], [0], [1], [0, 0, 1, 1], [], []>} : vector<72x128xbf16>, vector<128x128xbf16>, vector<72x128xf32> -> vector<72x128xf32>
    %48 = arith.addf %42, %47 : vector<72x128xf32>
    %c0_47 = arith.constant 0 : index
    %c10 = arith.constant 10 : index
    %c0_48 = arith.constant 0 : index
    %49 = vector.load %arg1[%c0_47, %c10, %c0_48] : memref<1x90x128xbf16, #tpu.memory_space<vmem>>, vector<1x72x128xbf16>
    %50 = vector.shape_cast %49 : vector<1x72x128xbf16> to vector<72x128xbf16>
    %c8 = arith.constant 8 : index
    %c0_49 = arith.constant 0 : index
    %c0_50 = arith.constant 0 : index
    %51 = vector.load %arg5[%c8, %c0_49, %c0_50] : memref<9x128x128xbf16, #tpu.memory_space<vmem>>, vector<1x128x128xbf16>
    %52 = vector.shape_cast %51 : vector<1x128x128xbf16> to vector<128x128xbf16>
    %cst_51 = arith.constant dense<0.000000e+00> : vector<72x128xf32>
    %53 = tpu.matmul %50, %52, %cst_51 {dimension_numbers = #tpu.dot_dimension_numbers<[1], [0], [0], [1], [0, 0, 1, 1], [], []>} : vector<72x128xbf16>, vector<128x128xbf16>, vector<72x128xf32> -> vector<72x128xf32>
    %54 = arith.addf %48, %53 : vector<72x128xf32>
    %c0_52 = arith.constant 0 : index
    %c0_53 = arith.constant 0 : index
    %55 = vector.load %arg6[%c0_52, %c0_53] : memref<1x128xf32, #tpu.memory_space<vmem>>, vector<1x128xf32>
    %56 = vector.broadcast %55 : vector<1x128xf32> to vector<72x128xf32>
    %57 = arith.addf %54, %56 : vector<72x128xf32>
    %cst_54 = arith.constant 0.000000e+00 : f32
    %58 = vector.broadcast %cst_54 : f32 to vector<72x128xf32>
    %59 = arith.maximumf %57, %58 : vector<72x128xf32>
    %60 = arith.truncf %59 : vector<72x128xf32> to vector<72x128xbf16>
    %c0_55 = arith.constant 0 : index
    %c0_56 = arith.constant 0 : index
    %c0_57 = arith.constant 0 : index
    %61 = vector.load %arg7[%c0_55, %c0_56, %c0_57] : memref<1x72x128xbf16, #tpu.memory_space<vmem>>, vector<1x72x128xbf16>
    %62 = vector.shape_cast %61 : vector<1x72x128xbf16> to vector<72x128xbf16>
    %63 = vector.shape_cast %60 : vector<72x128xbf16> to vector<1x72x128xbf16>
    tpu.vector_store %arg7[%c0_55, %c0_56, %c0_57], %63 {strides = array<i32>} : memref<1x72x128xbf16, #tpu.memory_space<vmem>>, vector<1x72x128xbf16>,
    return
  }
  func.func @transform_0(%arg0: i32) -> (i32, i32, i32) {
    %c0_i32 = arith.constant 0 : i32
    %c0_i32_0 = arith.constant 0 : i32
    %c0_i32_1 = arith.constant 0 : i32
    return %arg0, %c0_i32, %c0_i32_0 : i32, i32, i32
  }
  func.func @transform_1(%arg0: i32) -> (i32, i32, i32) {
    %c0_i32 = arith.constant 0 : i32
    %c0_i32_0 = arith.constant 0 : i32
    %c0_i32_1 = arith.constant 0 : i32
    return %arg0, %c0_i32, %c0_i32_0 : i32, i32, i32
  }
  func.func @transform_2(%arg0: i32) -> (i32, i32, i32) {
    %c0_i32 = arith.constant 0 : i32
    %c0_i32_0 = arith.constant 0 : i32
    %c0_i32_1 = arith.constant 0 : i32
    return %arg0, %c0_i32, %c0_i32_0 : i32, i32, i32
  }
  func.func @transform_3(%arg0: i32) -> (i32, i32, i32) {
    %c0_i32 = arith.constant 0 : i32
    %c0_i32_0 = arith.constant 0 : i32
    %c0_i32_1 = arith.constant 0 : i32
    return %arg0, %c0_i32, %c0_i32_0 : i32, i32, i32
  }
  func.func @transform_4(%arg0: i32) -> (i32, i32, i32) {
    %c0_i32 = arith.constant 0 : i32
    %c0_i32_0 = arith.constant 0 : i32
    %c0_i32_1 = arith.constant 0 : i32
    %c0_i32_2 = arith.constant 0 : i32
    return %c0_i32, %c0_i32_0, %c0_i32_1 : i32, i32, i32
  }
  func.func @transform_5(%arg0: i32) -> (i32, i32) {
    %c0_i32 = arith.constant 0 : i32
    %c0_i32_0 = arith.constant 0 : i32
    %c0_i32_1 = arith.constant 0 : i32
    return %c0_i32, %c0_i32_0 : i32, i32
  }
  func.func @transform_6(%arg0: i32) -> (i32, i32, i32) {
    %c0_i32 = arith.constant 0 : i32
    %c0_i32_0 = arith.constant 0 : i32
    %c0_i32_1 = arith.constant 0 : i32
    return %arg0, %c0_i32, %c0_i32_0 : i32, i32, i32
  }
}

</mosaic_0001>

<llo_original>
// kernel: tpu_custom_call.1
$region0: #{tpu_custom_call.1}
  #allocation0 [shape = 'u32[]', space=smem, size = 0x4, offset = 0x4, fixed_abs, tag = 'smem constant byte address 0x4 - core index']
  #allocation1 [shape = 'u32[144,128]{1,0:T(1,128)}', space=vmem, size = 0x12000, scoped, tag = 'internal scratch']
  %s0 = inlined_call_operand.vmem [shape: bf16[2,90,128], index: 0, kind: input, shape index: {}]
  %s1 = inlined_call_operand.vmem [shape: bf16[2,90,128], index: 1, kind: input, shape index: {}]
  %s2 = inlined_call_operand.vmem [shape: bf16[2,90,128], index: 2, kind: input, shape index: {}]
  %s3 = inlined_call_operand.vmem [shape: bf16[2,90,128], index: 3, kind: input, shape index: {}]
  %s4 = inlined_call_operand.vmem [shape: bf16[9,128,128], index: 4, kind: input, shape index: {}]
  %s5 = inlined_call_operand.vmem [shape: f32[1,128], index: 5, kind: input, shape index: {}]
  %s6 = inlined_call_operand.hbm [shape: bf16[2,72,128], index: 6, kind: output, shape index: {}]
  %s7 = sld [smem:[#allocation0]]
  $region57: #{tpu_custom_call.1} parent=0
    _
  %s9 = ssub.s32 1, %s7
  %s10 = scalar_select 0, %s9, %s7
  $region1: #{tpu_custom_call.1} parent=0
    #allocation2 [shape = 'u8[36864]{0}', space=vmem, size = 0x9000, scoped, tag = 'output window, operand 0']
    #allocation3 [shape = 's32[2]{0}', space=sflag, size = 0x8, scoped, tag = 'scoped memory for tpu_custom_call.1']
    %11 = vsyncpa [#allocation3], 0
    %s12 = scalar_lea.sflag [#allocation3], 1
    %13 = vsyncpa %s12, 0
    loop: start=0, step=1, limit=4
    $region2: #{tpu_custom_call.1} parent=1 // loop_pre_header
      _
    $region3: #{tpu_custom_call.1} parent=1 // loop_header
      %s15 = sphi 0, %s19
      %p16 = scmp.ge.s32.totalorder %s15, 4
      %s25 = sphi 0, %s27
      %s28 = sphi 0, %s25
      %s29 = sphi 0, %s28
      %s45 = sphi 0, %s29
      %s51 = sphi 0, %s53
      %s54 = sphi 0, %s51
      %s55 = sphi 0, %s54
      %s71 = sphi 0, %s55
      %s77 = sphi 0, %s79
      %s80 = sphi 0, %s77
      %s81 = sphi 0, %s80
      %s97 = sphi 0, %s81
      %s103 = sphi 0, %s105
      %s106 = sphi 0, %s103
      %s107 = sphi 0, %s106
      %s123 = sphi 0, %s107
      %s127 = sphi 0, %s127
      %s129 = sphi 0, %s127
      %s130 = sphi 0, %s129
      %s144 = sphi 0, %s130
      %s148 = sphi 0, %s148
      %s150 = sphi 0, %s148
      %s151 = sphi 0, %s150
      %s165 = sphi 0, %s151
      %s171 = sphi 0, %s173
      %s174 = sphi 0, %s171
      %s175 = sphi 0, %s174
      %s191 = sphi 0, %s175
    $region4: #{tpu_custom_call.1} parent=1 // loop_header_branch
      %18 = sbr.rel (%p16) target = $region8
    $region5: #{tpu_custom_call.1} parent=1 // loop_body
      %s20 = ssub.s32 %s15, 1
      %s21 = ssub.s32 %s15, 2
      %s22 = sadd.s32 %s15, 1
      %s23 = ssub.s32 %s15, %s22
      %p24 = scmp.eq.s32.totalorder %s23, 0
      %s26 = sadd.s32 %s25, 1
      %s27 = scalar_select %p24, %s25, %s26
      %p30 = pneg %p24
      %p31 = scmp.eq.s32.totalorder %s15, 1
      %p32 = por %p30, %p31
      %p33 = scmp.ne.s32.totalorder %s25, %s28
      %p34 = scmp.eq.s32.totalorder %s15, 0
      %p35 = por %p33, %p34
      %p36 = scmp.ne.s32.totalorder %s25, %s28
      %p37 = scmp.eq.s32.totalorder %s20, 1
      %p38 = por %p36, %p37
      %p39 = scmp.ne.s32.totalorder %s28, %s29
      %p40 = scmp.eq.s32.totalorder %s20, 0
      %p41 = por %p39, %p40
      %p42 = scmp.ne.s32.totalorder %s28, %s29
      %p43 = scmp.eq.s32.totalorder %s21, 1
      %p44 = por %p42, %p43
      %p46 = scmp.ne.s32.totalorder %s29, %s45
      %p47 = scmp.eq.s32.totalorder %s21, 0
      %p48 = por %p46, %p47
      %s49 = ssub.s32 %s15, %s22
      %p50 = scmp.eq.s32.totalorder %s49, 0
      %s52 = sadd.s32 %s51, 1
      %s53 = scalar_select %p50, %s51, %s52
      %p56 = pneg %p50
      %p57 = scmp.eq.s32.totalorder %s15, 1
      %p58 = por %p56, %p57
      %p59 = scmp.ne.s32.totalorder %s51, %s54
      %p60 = scmp.eq.s32.totalorder %s15, 0
      %p61 = por %p59, %p60
      %p62 = scmp.ne.s32.totalorder %s51, %s54
      %p63 = scmp.eq.s32.totalorder %s20, 1
      %p64 = por %p62, %p63
      %p65 = scmp.ne.s32.totalorder %s54, %s55
      %p66 = scmp.eq.s32.totalorder %s20, 0
      %p67 = por %p65, %p66
      %p68 = scmp.ne.s32.totalorder %s54, %s55
      %p69 = scmp.eq.s32.totalorder %s21, 1
      %p70 = por %p68, %p69
      %p72 = scmp.ne.s32.totalorder %s55, %s71
      %p73 = scmp.eq.s32.totalorder %s21, 0
      %p74 = por %p72, %p73
      %s75 = ssub.s32 %s15, %s22
      %p76 = scmp.eq.s32.totalorder %s75, 0
      %s78 = sadd.s32 %s77, 1
      %s79 = scalar_select %p76, %s77, %s78
      %p82 = pneg %p76
      %p83 = scmp.eq.s32.totalorder %s15, 1
      %p84 = por %p82, %p83
      %p85 = scmp.ne.s32.totalorder %s77, %s80
      %p86 = scmp.eq.s32.totalorder %s15, 0
      %p87 = por %p85, %p86
      %p88 = scmp.ne.s32.totalorder %s77, %s80
      %p89 = scmp.eq.s32.totalorder %s20, 1
      %p90 = por %p88, %p89
      %p91 = scmp.ne.s32.totalorder %s80, %s81
      %p92 = scmp.eq.s32.totalorder %s20, 0
      %p93 = por %p91, %p92
      %p94 = scmp.ne.s32.totalorder %s80, %s81
      %p95 = scmp.eq.s32.totalorder %s21, 1
      %p96 = por %p94, %p95
      %p98 = scmp.ne.s32.totalorder %s81, %s97
      %p99 = scmp.eq.s32.totalorder %s21, 0
      %p100 = por %p98, %p99
      %s101 = ssub.s32 %s15, %s22
      %p102 = scmp.eq.s32.totalorder %s101, 0
      %s104 = sadd.s32 %s103, 1
      %s105 = scalar_select %p102, %s103, %s104
      %p108 = pneg %p102
      %p109 = scmp.eq.s32.totalorder %s15, 1
      %p110 = por %p108, %p109
      %p111 = scmp.ne.s32.totalorder %s103, %s106
      %p112 = scmp.eq.s32.totalorder %s15, 0
      %p113 = por %p111, %p112
      %p114 = scmp.ne.s32.totalorder %s103, %s106
      %p115 = scmp.eq.s32.totalorder %s20, 1
      %p116 = por %p114, %p115
      %p117 = scmp.ne.s32.totalorder %s106, %s107
      %p118 = scmp.eq.s32.totalorder %s20, 0
      %p119 = por %p117, %p118
      %p120 = scmp.ne.s32.totalorder %s106, %s107
      %p121 = scmp.eq.s32.totalorder %s21, 1
      %p122 = por %p120, %p121
      %p124 = scmp.ne.s32.totalorder %s107, %s123
      %p125 = scmp.eq.s32.totalorder %s21, 0
      %p126 = por %p124, %p125
      %s128 = sadd.s32 %s127, 1
      %p131 = scmp.eq.s32.totalorder %s15, 1
      %p132 = scmp.ne.s32.totalorder %s127, %s129
      %p133 = scmp.eq.s32.totalorder %s15, 0
      %p134 = por %p132, %p133
      %p135 = scmp.ne.s32.totalorder %s127, %s129
      %p136 = scmp.eq.s32.totalorder %s20, 1
      %p137 = por %p135, %p136
      %p138 = scmp.ne.s32.totalorder %s129, %s130
      %p139 = scmp.eq.s32.totalorder %s20, 0
      %p140 = por %p138, %p139
      %p141 = scmp.ne.s32.totalorder %s129, %s130
      %p142 = scmp.eq.s32.totalorder %s21, 1
      %p143 = por %p141, %p142
      %p145 = scmp.ne.s32.totalorder %s130, %s144
      %p146 = scmp.eq.s32.totalorder %s21, 0
      %p147 = por %p145, %p146
      %s149 = sadd.s32 %s148, 1
      %p152 = scmp.eq.s32.totalorder %s15, 1
      %p153 = scmp.ne.s32.totalorder %s148, %s150
      %p154 = scmp.eq.s32.totalorder %s15, 0
      %p155 = por %p153, %p154
      %p156 = scmp.ne.s32.totalorder %s148, %s150
      %p157 = scmp.eq.s32.totalorder %s20, 1
      %p158 = por %p156, %p157
      %p159 = scmp.ne.s32.totalorder %s150, %s151
      %p160 = scmp.eq.s32.totalorder %s20, 0
      %p161 = por %p159, %p160
      %p162 = scmp.ne.s32.totalorder %s150, %s151
      %p163 = scmp.eq.s32.totalorder %s21, 1
      %p164 = por %p162, %p163
      %p166 = scmp.ne.s32.totalorder %s151, %s165
      %p167 = scmp.eq.s32.totalorder %s21, 0
      %p168 = por %p166, %p167
      %s169 = ssub.s32 %s15, %s22
      %p170 = scmp.eq.s32.totalorder %s169, 0
      %s172 = sadd.s32 %s171, 1
      %s173 = scalar_select %p170, %s171, %s172
      %p176 = pneg %p170
      %p177 = scmp.eq.s32.totalorder %s15, 1
      %p178 = por %p176, %p177
      %p179 = scmp.ne.s32.totalorder %s171, %s174
      %p180 = scmp.eq.s32.totalorder %s15, 0
      %p181 = por %p179, %p180
      %p182 = scmp.ne.s32.totalorder %s171, %s174
      %p183 = scmp.eq.s32.totalorder %s20, 1
      %p184 = por %p182, %p183
      %p185 = scmp.ne.s32.totalorder %s174, %s175
      %p186 = scmp.eq.s32.totalorder %s20, 0
      %p187 = por %p185, %p186
      %p188 = scmp.ne.s32.totalorder %s174, %s175
      %p189 = scmp.eq.s32.totalorder %s21, 1
      %p190 = por %p188, %p189
      %p192 = scmp.ne.s32.totalorder %s175, %s191
      %p193 = scmp.eq.s32.totalorder %s21, 0
      %p194 = por %p192, %p193
      %p195 = scmp.le.s32.totalorder 1, %s15
      %p196 = scmp.lt.s32.totalorder %s15, 3
      %p197 = pnand %p195, %p196
      %p198 = pneg %p197
      // Predicated region
      $region9: #{tpu_custom_call.1} parent=5 // pred_check
        _
      $region10: #{tpu_custom_call.1} parent=5 // pred_check_branch
        %200 = sbr.rel (%p197) target = $region12
      $region11: #{tpu_custom_call.1} parent=5 // pred_region
        %s201 = ssub.s32 %s15, 1
        // Predicated region
        $region13: #{tpu_custom_call.1} parent=11 // pred_check
          %p202 = pneg %p140
        $region14: #{tpu_custom_call.1} parent=11 // pred_check_branch
          %204 = sbr.rel (%p202) target = $region16
        $region15: #{tpu_custom_call.1} parent=11 // pred_region
          _
        $region16: #{tpu_custom_call.1} parent=11 // pred_fallthru
          _
        // Predicated region
        $region17: #{tpu_custom_call.1} parent=11 // pred_check
          %p205 = pneg %p161
        $region18: #{tpu_custom_call.1} parent=11 // pred_check_branch
          %207 = sbr.rel (%p205) target = $region20
        $region19: #{tpu_custom_call.1} parent=11 // pred_region
          _
        $region20: #{tpu_custom_call.1} parent=11 // pred_fallthru
          _
      $region12: #{tpu_custom_call.1} parent=5 // pred_fallthru
        _
      %p208 = scmp.lt.s32.totalorder %s15, 2
      // Predicated region
      $region21: #{tpu_custom_call.1} parent=5 // pred_check
        %p209 = pneg %p208
      $region22: #{tpu_custom_call.1} parent=5 // pred_check_branch
        %211 = sbr.rel (%p209) target = $region24
      $region23: #{tpu_custom_call.1} parent=5 // pred_region
        // Predicated region
        $region25: #{tpu_custom_call.1} parent=23 // pred_check
          %p212 = pneg %p35
        $region26: #{tpu_custom_call.1} parent=23 // pred_check_branch
          %214 = sbr.rel (%p212) target = $region28
        $region27: #{tpu_custom_call.1} parent=23 // pred_region
          %p215 = scmp.lt.s32.totalorder %s15, 1
          %s216 = scalar_select %p215, %s15, 1
          %s217 = smul.addr %s216, 12
          %s218 = smul.addr %s217, 4
          %s219 = scalar_lea.vmem %s0, %s218
        $region28: #{tpu_custom_call.1} parent=23 // pred_fallthru
          _
        // Predicated region
        $region29: #{tpu_custom_call.1} parent=23 // pred_check
          %p220 = pneg %p61
        $region30: #{tpu_custom_call.1} parent=23 // pred_check_branch
          %222 = sbr.rel (%p220) target = $region32
        $region31: #{tpu_custom_call.1} parent=23 // pred_region
          %p223 = scmp.lt.s32.totalorder %s15, 1
          %s224 = scalar_select %p223, %s15, 1
          %s225 = smul.addr %s224, 12
          %s226 = smul.addr %s225, 4
          %s227 = scalar_lea.vmem %s1, %s226
        $region32: #{tpu_custom_call.1} parent=23 // pred_fallthru
          _
        // Predicated region
        $region33: #{tpu_custom_call.1} parent=23 // pred_check
          %p228 = pneg %p87
        $region34: #{tpu_custom_call.1} parent=23 // pred_check_branch
          %230 = sbr.rel (%p228) target = $region36
        $region35: #{tpu_custom_call.1} parent=23 // pred_region
          %p231 = scmp.lt.s32.totalorder %s15, 1
          %s232 = scalar_select %p231, %s15, 1
          %s233 = smul.addr %s232, 12
          %s234 = smul.addr %s233, 4
          %s235 = scalar_lea.vmem %s2, %s234
        $region36: #{tpu_custom_call.1} parent=23 // pred_fallthru
          _
        // Predicated region
        $region37: #{tpu_custom_call.1} parent=23 // pred_check
          %p236 = pneg %p113
        $region38: #{tpu_custom_call.1} parent=23 // pred_check_branch
          %238 = sbr.rel (%p236) target = $region40
        $region39: #{tpu_custom_call.1} parent=23 // pred_region
          %p239 = scmp.lt.s32.totalorder %s15, 1
          %s240 = scalar_select %p239, %s15, 1
          %s241 = smul.addr %s240, 12
          %s242 = smul.addr %s241, 4
          %s243 = scalar_lea.vmem %s3, %s242
        $region40: #{tpu_custom_call.1} parent=23 // pred_fallthru
          _
      $region24: #{tpu_custom_call.1} parent=5 // pred_fallthru
        _
      %p244 = scmp.le.s32.totalorder 1, %s15
      %p245 = scmp.lt.s32.totalorder %s15, 3
      %p246 = pnand %p244, %p245
      %p247 = pneg %p246
      // Predicated region
      $region41: #{tpu_custom_call.1} parent=5 // pred_check
        _
      $region42: #{tpu_custom_call.1} parent=5 // pred_check_branch
        %249 = sbr.rel (%p246) target = $region44
      $region43: #{tpu_custom_call.1} parent=5 // pred_region
        %s250 = ssub.s32 %s15, 1
        %p251 = scmp.lt.s32.totalorder %s20, 1
        %s252 = scalar_select %p251, %s20, 1
        %s253 = smul.addr %s252, 12
        %s254 = smul.addr %s253, 4
        %s255 = scalar_lea.vmem %s0, %s254
        %p256 = pneg %p41
        %p257 = pneg %p38
        %p258 = scmp.lt.s32.totalorder %s20, 1
        %s259 = scalar_select %p258, %s20, 1
        %s260 = smul.addr %s259, 12
        %s261 = smul.addr %s260, 4
        %s262 = scalar_lea.vmem %s1, %s261
        %p263 = pneg %p67
        %p264 = pneg %p64
        %p265 = scmp.lt.s32.totalorder %s20, 1
        %s266 = scalar_select %p265, %s20, 1
        %s267 = smul.addr %s266, 12
        %s268 = smul.addr %s267, 4
        %s269 = scalar_lea.vmem %s2, %s268
        %p270 = pneg %p93
        %p271 = pneg %p90
        %p272 = scmp.lt.s32.totalorder %s20, 1
        %s273 = scalar_select %p272, %s20, 1
        %s274 = smul.addr %s273, 12
        %s275 = smul.addr %s274, 4
        %s276 = scalar_lea.vmem %s3, %s275
        %p277 = pneg %p119
        %p278 = pneg %p116
        %p279 = pneg %p140
        %p280 = pneg %p137
        %p281 = pneg %p161
        %p282 = pneg %p158
        %p283 = pneg %p187
        %p284 = pneg %p184
        %s285 = sand.u32 %s174, 1
        %s286 = scalar_lea.sflag [#allocation3], %s285
        %s287 = sand.u32 %s174, 1
        %s288 = smul.addr %s287, 36
        %s289 = scalar_lea.vmem [#allocation2], %s288
        %p290 = scmp.lt.s32.totalorder %s20, 1
        %s291 = scalar_select %p290, %s20, 1
        %s292 = smul.addr %s291, 12
        %s293 = smul.addr %s292, 4
        %s294 = scalar_lea.vmem %s0, %s293
        %p295 = scmp.lt.s32.totalorder %s20, 1
        %s296 = scalar_select %p295, %s20, 1
        %s297 = smul.addr %s296, 12
        %s298 = smul.addr %s297, 4
        %s299 = scalar_lea.vmem %s1, %s298
        %p300 = scmp.lt.s32.totalorder %s20, 1
        %s301 = scalar_select %p300, %s20, 1
        %s302 = smul.addr %s301, 12
        %s303 = smul.addr %s302, 4
        %s304 = scalar_lea.vmem %s2, %s303
        %p305 = scmp.lt.s32.totalorder %s20, 1
        %s306 = scalar_select %p305, %s20, 1
        %s307 = smul.addr %s306, 12
        %s308 = smul.addr %s307, 4
        %s309 = scalar_lea.vmem %s3, %s308
        %v311 = vld [vmem:[%s294] sm:$0xf]
        %v312 = vld [vmem:[%s294 + $0x4] sm:$0xf]
        %v313 = vld [vmem:[%s294 + $0x8] sm:$0xf]
        %v314 = vld [vmem:[%s294 + $0xc] sm:$0xf]
        %v315 = vld [vmem:[%s294 + $0x10] sm:$0xf]
        %v316 = vld [vmem:[%s294 + $0x14] sm:$0xf]
        %v317 = vld [vmem:[%s294 + $0x18] sm:$0xf]
        %v318 = vld [vmem:[%s294 + $0x1c] sm:$0xf]
        %v319 = vld [vmem:[%s294 + $0x20] sm:$0xf]
        %v320 = vld [vmem:[%s4] sm:$0xf]
        %v321 = vld [vmem:[%s4 + $0x4] sm:$0xf]
        %v322 = vld [vmem:[%s4 + $0x8] sm:$0xf]
        %v323 = vld [vmem:[%s4 + $0xc] sm:$0xf]
        %v324 = vld [vmem:[%s4 + $0x10] sm:$0xf]
        %v325 = vld [vmem:[%s4 + $0x14] sm:$0xf]
        %v326 = vld [vmem:[%s4 + $0x18] sm:$0xf]
        %v327 = vld [vmem:[%s4 + $0x1c] sm:$0xf]
        %v328 = vld [vmem:[%s4 + $0x20] sm:$0xf]
        %v329 = vld [vmem:[%s4 + $0x24] sm:$0xf]
        %v330 = vld [vmem:[%s4 + $0x28] sm:$0xf]
        %v331 = vld [vmem:[%s4 + $0x2c] sm:$0xf]
        %v332 = vld [vmem:[%s4 + $0x30] sm:$0xf]
        %v333 = vld [vmem:[%s4 + $0x34] sm:$0xf]
        %v334 = vld [vmem:[%s4 + $0x38] sm:$0xf]
        %v335 = vld [vmem:[%s4 + $0x3c] sm:$0xf]
        %v336 = vld [vmem:[%s299] sm:$0xf]
        %v337 = vld [vmem:[%s299 + $0x4] sm:$0xf]
        %v338 = vld [vmem:[%s299 + $0x8] sm:$0xf]
        %v339 = vld [vmem:[%s299 + $0xc] sm:$0xf]
        %v340 = vld [vmem:[%s299 + $0x10] sm:$0xf]
        %v341 = vld [vmem:[%s299 + $0x14] sm:$0xf]
        %v342 = vld [vmem:[%s299 + $0x18] sm:$0xf]
        %v343 = vld [vmem:[%s299 + $0x1c] sm:$0xf]
        %v344 = vld [vmem:[%s299 + $0x20] sm:$0xf]
        %s345 = scalar_lea.vmem %s4, 64
        %v346 = vld [vmem:[%s345] sm:$0xf]
        %v347 = vld [vmem:[%s345 + $0x4] sm:$0xf]
        %v348 = vld [vmem:[%s345 + $0x8] sm:$0xf]
        %v349 = vld [vmem:[%s345 + $0xc] sm:$0xf]
        %v350 = vld [vmem:[%s345 + $0x10] sm:$0xf]
        %v351 = vld [vmem:[%s345 + $0x14] sm:$0xf]
        %v352 = vld [vmem:[%s345 + $0x18] sm:$0xf]
        %v353 = vld [vmem:[%s345 + $0x1c] sm:$0xf]
        %v354 = vld [vmem:[%s345 + $0x20] sm:$0xf]
        %v355 = vld [vmem:[%s345 + $0x24] sm:$0xf]
        %v356 = vld [vmem:[%s345 + $0x28] sm:$0xf]
        %v357 = vld [vmem:[%s345 + $0x2c] sm:$0xf]
        %v358 = vld [vmem:[%s345 + $0x30] sm:$0xf]
        %v359 = vld [vmem:[%s345 + $0x34] sm:$0xf]
        %v360 = vld [vmem:[%s345 + $0x38] sm:$0xf]
        %v361 = vld [vmem:[%s345 + $0x3c] sm:$0xf]
        %v371 = vunpack.c.l.b16 %v336
        %v372 = vunpack.c.l.b16 %v337
        %v373 = vunpack.c.l.b16 %v338
        %v374 = vunpack.c.l.b16 %v339
        %v375 = vunpack.c.l.b16 %v340
        %v376 = vunpack.c.l.b16 %v341
        %v377 = vunpack.c.l.b16 %v342
        %v378 = vunpack.c.l.b16 %v343
        %v379 = vunpack.c.l.b16 %v344
        %v380 = vpack.c.b16 %v372, %v371
        %v381 = vpack.c.b16 %v374, %v373
        %v382 = vpack.c.b16 %v376, %v375
        %v383 = vpack.c.b16 %v378, %v377
        %v384 = vpack.c.b16 %v379, %v379
        %v406 = vunpack.c.l.b16 %v346
        %v407 = vunpack.c.l.b16 %v347
        %v408 = vunpack.c.l.b16 %v348
        %v409 = vunpack.c.l.b16 %v349
        %v410 = vunpack.c.l.b16 %v350
        %v411 = vunpack.c.l.b16 %v351
        %v412 = vunpack.c.l.b16 %v352
        %v413 = vunpack.c.l.b16 %v353
        %v414 = vunpack.c.l.b16 %v354
        %v415 = vunpack.c.l.b16 %v355
        %v416 = vunpack.c.l.b16 %v356
        %v417 = vunpack.c.l.b16 %v357
        %v418 = vunpack.c.l.b16 %v358
        %v419 = vunpack.c.l.b16 %v359
        %v420 = vunpack.c.l.b16 %v360
        %v421 = vunpack.c.l.b16 %v361
        %v422 = vpack.c.b16 %v407, %v406
        %v423 = vpack.c.b16 %v409, %v408
        %v424 = vpack.c.b16 %v411, %v410
        %v425 = vpack.c.b16 %v413, %v412
        %v426 = vpack.c.b16 %v415, %v414
        %v427 = vpack.c.b16 %v417, %v416
        %v428 = vpack.c.b16 %v419, %v418
        %v429 = vpack.c.b16 %v421, %v420
        %438 = vmatprep.subr.bf16.mxu0 0
        %439 = vmatpush1.bf16.msra.mxu0 %v422
        %440 = vmatprep.subr.bf16.mxu0 0
        %441 = vmatpush1.bf16.msra.mxu0 %v423
        %442 = vmatprep.subr.bf16.mxu0 0
        %443 = vmatpush1.bf16.msra.mxu0 %v424
        %444 = vmatprep.subr.bf16.mxu0 0
        %445 = vmatpush1.bf16.msra.mxu0 %v425
        %446 = vmatprep.subr.bf16.mxu0 0
        %447 = vmatpush1.bf16.msra.mxu0 %v426
        %448 = vmatprep.subr.bf16.mxu0 0
        %449 = vmatpush1.bf16.msra.mxu0 %v427
        %450 = vmatprep.subr.bf16.mxu0 0
        %451 = vmatpush1.bf16.msra.mxu0 %v428
        %452 = vmatprep.subr.bf16.mxu0 0
        %453 = vmatpush1.bf16.msra.mxu0 %v429
        %454 = vmatprep.subr.bf16.mxu0 0
        %455 = vmatpush1.bf16.msra.mxu0 0
        %456 = vmatprep.subr.bf16.mxu0 0
        %457 = vmatpush1.bf16.msra.mxu0 0
        %458 = vmatprep.subr.bf16.mxu0 0
        %459 = vmatpush1.bf16.msra.mxu0 0
        %460 = vmatprep.subr.bf16.mxu0 0
        %461 = vmatpush1.bf16.msra.mxu0 0
        %462 = vmatprep.subr.bf16.mxu0 0
        %463 = vmatpush1.bf16.msra.mxu0 0
        %464 = vmatprep.subr.bf16.mxu0 0
        %465 = vmatpush1.bf16.msra.mxu0 0
        %466 = vmatprep.subr.bf16.mxu0 0
        %467 = vmatpush1.bf16.msra.mxu0 0
        %468 = vmatprep.subr.bf16.mxu0 0
        %469 = vmatpush1.bf16.msra.mxu0 0
        %470 = vmatprep.mubr.bf16.mxu0 0
        %471 = vmatmul.mubr.bf16.gmra.mrb[0].mxu0 %v380
        %v472 = vpop.f32.mrb[0].mxu0
        %v473 = vadd.f32 0.0, %v472
        %v474 = vpop.f32.mrb[0].mxu0
        %v475 = vpop.f32.mrb[0].mxu0
        %v476 = vadd.f32 0.0, %v475
        %v477 = vpop.f32.mrb[0].mxu0
        %478 = vmatprep.mubr.bf16.mxu0 0
        %479 = vmatmul.mubr.bf16.gmra.mrb[0].mxu0 %v381
        %v480 = vpop.f32.mrb[0].mxu0
        %v481 = vadd.f32 0.0, %v480
        %v482 = vpop.f32.mrb[0].mxu0
        %v483 = vpop.f32.mrb[0].mxu0
        %v484 = vadd.f32 0.0, %v483
        %v485 = vpop.f32.mrb[0].mxu0
        %486 = vmatprep.mubr.bf16.mxu0 0
        %487 = vmatmul.mubr.bf16.gmra.mrb[0].mxu0 %v382
        %v488 = vpop.f32.mrb[0].mxu0
        %v489 = vadd.f32 0.0, %v488
        %v490 = vpop.f32.mrb[0].mxu0
        %v491 = vpop.f32.mrb[0].mxu0
        %v492 = vadd.f32 0.0, %v491
        %v493 = vpop.f32.mrb[0].mxu0
        %494 = vmatprep.mubr.bf16.mxu0 0
        %495 = vmatmul.mubr.bf16.gmra.mrb[0].mxu0 %v383
        %v496 = vpop.f32.mrb[0].mxu0
        %v497 = vadd.f32 0.0, %v496
        %v498 = vpop.f32.mrb[0].mxu0
        %v499 = vpop.f32.mrb[0].mxu0
        %v500 = vadd.f32 0.0, %v499
        %v501 = vpop.f32.mrb[0].mxu0
        %502 = vmatprep.mubr.bf16.mxu0 0
        %503 = vmatmul.mubr.bf16.gmra.mrb[0].mxu0 %v384
        %v504 = vpop.f32.mrb[0].mxu0
        %v505 = vadd.f32 0.0, %v504
        %v506 = vpop.f32.mrb[0].mxu0
        %v507 = vpop.f32.mrb[0].mxu0
        %v508 = vpop.f32.mrb[0].mxu0
        %509 = vdwg.mxu0
        %v519 = vunpack.c.l.b16 %v311
        %v520 = vunpack.c.l.b16 %v312
        %v521 = vunpack.c.l.b16 %v313
        %v522 = vunpack.c.l.b16 %v314
        %v523 = vunpack.c.l.b16 %v315
        %v524 = vunpack.c.l.b16 %v316
        %v525 = vunpack.c.l.b16 %v317
        %v526 = vunpack.c.l.b16 %v318
        %v527 = vunpack.c.l.b16 %v319
        %v528 = vpack.c.b16 %v520, %v519
        %v529 = vpack.c.b16 %v522, %v521
        %v530 = vpack.c.b16 %v524, %v523
        %v531 = vpack.c.b16 %v526, %v525
        %v532 = vpack.c.b16 %v527, %v527
        %v554 = vunpack.c.l.b16 %v320
        %v555 = vunpack.c.l.b16 %v321
        %v556 = vunpack.c.l.b16 %v322
        %v557 = vunpack.c.l.b16 %v323
        %v558 = vunpack.c.l.b16 %v324
        %v559 = vunpack.c.l.b16 %v325
        %v560 = vunpack.c.l.b16 %v326
        %v561 = vunpack.c.l.b16 %v327
        %v562 = vunpack.c.l.b16 %v328
        %v563 = vunpack.c.l.b16 %v329
        %v564 = vunpack.c.l.b16 %v330
        %v565 = vunpack.c.l.b16 %v331
        %v566 = vunpack.c.l.b16 %v332
        %v567 = vunpack.c.l.b16 %v333
        %v568 = vunpack.c.l.b16 %v334
        %v569 = vunpack.c.l.b16 %v335
        %v570 = vpack.c.b16 %v555, %v554
        %v571 = vpack.c.b16 %v557, %v556
        %v572 = vpack.c.b16 %v559, %v558
        %v573 = vpack.c.b16 %v561, %v560
        %v574 = vpack.c.b16 %v563, %v562
        %v575 = vpack.c.b16 %v565, %v564
        %v576 = vpack.c.b16 %v567, %v566
        %v577 = vpack.c.b16 %v569, %v568
        %586 = vmatprep.subr.bf16.mxu0 0
        %587 = vmatpush1.bf16.msra.mxu0 %v570
        %588 = vmatprep.subr.bf16.mxu0 0
        %589 = vmatpush1.bf16.msra.mxu0 %v571
        %590 = vmatprep.subr.bf16.mxu0 0
        %591 = vmatpush1.bf16.msra.mxu0 %v572
        %592 = vmatprep.subr.bf16.mxu0 0
        %593 = vmatpush1.bf16.msra.mxu0 %v573
        %594 = vmatprep.subr.bf16.mxu0 0
        %595 = vmatpush1.bf16.msra.mxu0 %v574
        %596 = vmatprep.subr.bf16.mxu0 0
        %597 = vmatpush1.bf16.msra.mxu0 %v575
        %598 = vmatprep.subr.bf16.mxu0 0
        %599 = vmatpush1.bf16.msra.mxu0 %v576
        %600 = vmatprep.subr.bf16.mxu0 0
        %601 = vmatpush1.bf16.msra.mxu0 %v577
        %602 = vmatprep.subr.bf16.mxu0 0
        %603 = vmatpush1.bf16.msra.mxu0 0
        %604 = vmatprep.subr.bf16.mxu0 0
        %605 = vmatpush1.bf16.msra.mxu0 0
        %606 = vmatprep.subr.bf16.mxu0 0
        %607 = vmatpush1.bf16.msra.mxu0 0
        %608 = vmatprep.subr.bf16.mxu0 0
        %609 = vmatpush1.bf16.msra.mxu0 0
        %610 = vmatprep.subr.bf16.mxu0 0
        %611 = vmatpush1.bf16.msra.mxu0 0
        %612 = vmatprep.subr.bf16.mxu0 0
        %613 = vmatpush1.bf16.msra.mxu0 0
        %614 = vmatprep.subr.bf16.mxu0 0
        %615 = vmatpush1.bf16.msra.mxu0 0
        %616 = vmatprep.subr.bf16.mxu0 0
        %617 = vmatpush1.bf16.msra.mxu0 0
        %618 = vmatprep.mubr.bf16.mxu0 0
        %619 = vmatmul.mubr.bf16.gmra.mrb[0].mxu0 %v528
        %v620 = vpop.f32.mrb[0].mxu0
        %v621 = vadd.f32 %v473, %v620
        %v622 = vpop.f32.mrb[0].mxu0
        %v623 = vpop.f32.mrb[0].mxu0
        %v624 = vadd.f32 %v476, %v623
        %v625 = vpop.f32.mrb[0].mxu0
        %626 = vmatprep.mubr.bf16.mxu0 0
        %627 = vmatmul.mubr.bf16.gmra.mrb[0].mxu0 %v529
        %v628 = vpop.f32.mrb[0].mxu0
        %v629 = vadd.f32 %v481, %v628
        %v630 = vpop.f32.mrb[0].mxu0
        %v631 = vpop.f32.mrb[0].mxu0
        %v632 = vadd.f32 %v484, %v631
        %v633 = vpop.f32.mrb[0].mxu0
        %634 = vmatprep.mubr.bf16.mxu0 0
        %635 = vmatmul.mubr.bf16.gmra.mrb[0].mxu0 %v530
        %v636 = vpop.f32.mrb[0].mxu0
        %v637 = vadd.f32 %v489, %v636
        %v638 = vpop.f32.mrb[0].mxu0
        %v639 = vpop.f32.mrb[0].mxu0
        %v640 = vadd.f32 %v492, %v639
        %v641 = vpop.f32.mrb[0].mxu0
        %642 = vmatprep.mubr.bf16.mxu0 0
        %643 = vmatmul.mubr.bf16.gmra.mrb[0].mxu0 %v531
        %v644 = vpop.f32.mrb[0].mxu0
        %v645 = vadd.f32 %v497, %v644
        %v646 = vpop.f32.mrb[0].mxu0
        %v647 = vpop.f32.mrb[0].mxu0
        %v648 = vadd.f32 %v500, %v647
        %v649 = vpop.f32.mrb[0].mxu0
        %650 = vmatprep.mubr.bf16.mxu0 0
        %651 = vmatmul.mubr.bf16.gmra.mrb[0].mxu0 %v532
        %v652 = vpop.f32.mrb[0].mxu0
        %v653 = vadd.f32 %v505, %v652
        %v654 = vpop.f32.mrb[0].mxu0
        %v655 = vpop.f32.mrb[0].mxu0
        %v656 = vpop.f32.mrb[0].mxu0
        %657 = vdwg.mxu0
        %v658 = vld [vmem:[%s294] sm:$0xf]
        %v659 = vld [vmem:[%s294 + $0x4] sm:$0xf]
        %v660 = vld [vmem:[%s294 + $0x8] sm:$0xf]
        %v661 = vld [vmem:[%s294 + $0xc] sm:$0xf]
        %v662 = vld [vmem:[%s294 + $0x10] sm:$0xf]
        %v663 = vld [vmem:[%s294 + $0x14] sm:$0xf]
        %v664 = vld [vmem:[%s294 + $0x18] sm:$0xf]
        %v665 = vld [vmem:[%s294 + $0x1c] sm:$0xf]
        %v666 = vld [vmem:[%s294 + $0x20] sm:$0xf]
        %v667 = vld [vmem:[%s294 + $0x24] sm:$0x1]
        %s668 = scalar_lea.vmem %s4, 128
        %v669 = vld [vmem:[%s668] sm:$0xf]
        %v670 = vld [vmem:[%s668 + $0x4] sm:$0xf]
        %v671 = vld [vmem:[%s668 + $0x8] sm:$0xf]
        %v672 = vld [vmem:[%s668 + $0xc] sm:$0xf]
        %v673 = vld [vmem:[%s668 + $0x10] sm:$0xf]
        %v674 = vld [vmem:[%s668 + $0x14] sm:$0xf]
        %v675 = vld [vmem:[%s668 + $0x18] sm:$0xf]
        %v676 = vld [vmem:[%s668 + $0x1c] sm:$0xf]
        %v677 = vld [vmem:[%s668 + $0x20] sm:$0xf]
        %v678 = vld [vmem:[%s668 + $0x24] sm:$0xf]
        %v679 = vld [vmem:[%s668 + $0x28] sm:$0xf]
        %v680 = vld [vmem:[%s668 + $0x2c] sm:$0xf]
        %v681 = vld [vmem:[%s668 + $0x30] sm:$0xf]
        %v682 = vld [vmem:[%s668 + $0x34] sm:$0xf]
        %v683 = vld [vmem:[%s668 + $0x38] sm:$0xf]
        %v684 = vld [vmem:[%s668 + $0x3c] sm:$0xf]
        %v695 = vunpack.c.l.b16 %v658
        %v696 = vunpack.c.l.b16 %v659
        %v697 = vunpack.c.l.b16 %v660
        %v698 = vunpack.c.l.b16 %v661
        %v699 = vunpack.c.l.b16 %v662
        %v700 = vunpack.c.l.b16 %v663
        %v701 = vunpack.c.l.b16 %v664
        %v702 = vunpack.c.l.b16 %v665
        %v703 = vunpack.c.l.b16 %v666
        %v704 = vunpack.c.l.b16 %v667
        %v705 = vpack.c.b16 %v696, %v695
        %v706 = vpack.c.b16 %v698, %v697
        %v707 = vpack.c.b16 %v700, %v699
        %v708 = vpack.c.b16 %v702, %v701
        %v709 = vpack.c.b16 %v704, %v703
        %vm710 = vsmask.f32 7424
        %v712 = vshrl.u32 %v705, 16
        %v714 = vshll.u32 %v705, 16
        %v716 = vrot.slane %v714, 1
        %v717 = vor.u32 %v712, %v716
        %v719 = vshll.u32 %v706, 16
        %v721 = vrot.slane %v719, 1
        %v722 = vsel %vm710, %v717, %v721
        %v723 = vshrl.u32 %v706, 16
        %v725 = vor.u32 %v723, %v721
        %v727 = vshll.u32 %v707, 16
        %v729 = vrot.slane %v727, 1
        %v730 = vsel %vm710, %v725, %v729
        %v731 = vshrl.u32 %v707, 16
        %v733 = vor.u32 %v731, %v729
        %v735 = vshll.u32 %v708, 16
        %v737 = vrot.slane %v735, 1
        %v738 = vsel %vm710, %v733, %v737
        %v739 = vshrl.u32 %v708, 16
        %v741 = vor.u32 %v739, %v737
        %v743 = vshll.u32 %v709, 16
        %v745 = vrot.slane %v743, 1
        %v746 = vsel %vm710, %v741, %v745
        %v747 = vshrl.u32 %v709, 16
        %v749 = vor.u32 %v747, %v745
        %v771 = vunpack.c.l.b16 %v669
        %v772 = vunpack.c.l.b16 %v670
        %v773 = vunpack.c.l.b16 %v671
        %v774 = vunpack.c.l.b16 %v672
        %v775 = vunpack.c.l.b16 %v673
        %v776 = vunpack.c.l.b16 %v674
        %v777 = vunpack.c.l.b16 %v675
        %v778 = vunpack.c.l.b16 %v676
        %v779 = vunpack.c.l.b16 %v677
        %v780 = vunpack.c.l.b16 %v678
        %v781 = vunpack.c.l.b16 %v679
        %v782 = vunpack.c.l.b16 %v680
        %v783 = vunpack.c.l.b16 %v681
        %v784 = vunpack.c.l.b16 %v682
        %v785 = vunpack.c.l.b16 %v683
        %v786 = vunpack.c.l.b16 %v684
        %v787 = vpack.c.b16 %v772, %v771
        %v788 = vpack.c.b16 %v774, %v773
        %v789 = vpack.c.b16 %v776, %v775
        %v790 = vpack.c.b16 %v778, %v777
        %v791 = vpack.c.b16 %v780, %v779
        %v792 = vpack.c.b16 %v782, %v781
        %v793 = vpack.c.b16 %v784, %v783
        %v794 = vpack.c.b16 %v786, %v785
        %803 = vmatprep.subr.bf16.mxu0 0
        %804 = vmatpush1.bf16.msra.mxu0 %v787
        %805 = vmatprep.subr.bf16.mxu0 0
        %806 = vmatpush1.bf16.msra.mxu0 %v788
        %807 = vmatprep.subr.bf16.mxu0 0
        %808 = vmatpush1.bf16.msra.mxu0 %v789
        %809 = vmatprep.subr.bf16.mxu0 0
        %810 = vmatpush1.bf16.msra.mxu0 %v790
        %811 = vmatprep.subr.bf16.mxu0 0
        %812 = vmatpush1.bf16.msra.mxu0 %v791
        %813 = vmatprep.subr.bf16.mxu0 0
        %814 = vmatpush1.bf16.msra.mxu0 %v792
        %815 = vmatprep.subr.bf16.mxu0 0
        %816 = vmatpush1.bf16.msra.mxu0 %v793
        %817 = vmatprep.subr.bf16.mxu0 0
        %818 = vmatpush1.bf16.msra.mxu0 %v794
        %819 = vmatprep.subr.bf16.mxu0 0
        %820 = vmatpush1.bf16.msra.mxu0 0
        %821 = vmatprep.subr.bf16.mxu0 0
        %822 = vmatpush1.bf16.msra.mxu0 0
        %823 = vmatprep.subr.bf16.mxu0 0
        %824 = vmatpush1.bf16.msra.mxu0 0
        %825 = vmatprep.subr.bf16.mxu0 0
        %826 = vmatpush1.bf16.msra.mxu0 0
        %827 = vmatprep.subr.bf16.mxu0 0
        %828 = vmatpush1.bf16.msra.mxu0 0
        %829 = vmatprep.subr.bf16.mxu0 0
        %830 = vmatpush1.bf16.msra.mxu0 0
        %831 = vmatprep.subr.bf16.mxu0 0
        %832 = vmatpush1.bf16.msra.mxu0 0
        %833 = vmatprep.subr.bf16.mxu0 0
        %834 = vmatpush1.bf16.msra.mxu0 0
        %835 = vmatprep.mubr.bf16.mxu0 0
        %836 = vmatmul.mubr.bf16.gmra.mrb[0].mxu0 %v722
        %v837 = vpop.f32.mrb[0].mxu0
        %v838 = vadd.f32 0.0, %v837
        %v839 = vpop.f32.mrb[0].mxu0
        %v840 = vpop.f32.mrb[0].mxu0
        %v841 = vadd.f32 0.0, %v840
        %v842 = vpop.f32.mrb[0].mxu0
        %843 = vmatprep.mubr.bf16.mxu0 0
        %844 = vmatmul.mubr.bf16.gmra.mrb[0].mxu0 %v730
        %v845 = vpop.f32.mrb[0].mxu0
        %v846 = vadd.f32 0.0, %v845
        %v847 = vpop.f32.mrb[0].mxu0
        %v848 = vpop.f32.mrb[0].mxu0
        %v849 = vadd.f32 0.0, %v848
        %v850 = vpop.f32.mrb[0].mxu0
        %851 = vmatprep.mubr.bf16.mxu0 0
        %852 = vmatmul.mubr.bf16.gmra.mrb[0].mxu0 %v738
        %v853 = vpop.f32.mrb[0].mxu0
        %v854 = vadd.f32 0.0, %v853
        %v855 = vpop.f32.mrb[0].mxu0
        %v856 = vpop.f32.mrb[0].mxu0
        %v857 = vadd.f32 0.0, %v856
        %v858 = vpop.f32.mrb[0].mxu0
        %859 = vmatprep.mubr.bf16.mxu0 0
        %860 = vmatmul.mubr.bf16.gmra.mrb[0].mxu0 %v746
        %v861 = vpop.f32.mrb[0].mxu0
        %v862 = vadd.f32 0.0, %v861
        %v863 = vpop.f32.mrb[0].mxu0
        %v864 = vpop.f32.mrb[0].mxu0
        %v865 = vadd.f32 0.0, %v864
        %v866 = vpop.f32.mrb[0].mxu0
        %867 = vmatprep.mubr.bf16.mxu0 0
        %868 = vmatmul.mubr.bf16.gmra.mrb[0].mxu0 %v749
        %v869 = vpop.f32.mrb[0].mxu0
        %v870 = vadd.f32 0.0, %v869
        %v871 = vpop.f32.mrb[0].mxu0
        %v872 = vpop.f32.mrb[0].mxu0
        %v873 = vpop.f32.mrb[0].mxu0
        %874 = vdwg.mxu0
        %v875 = vadd.f32 %v621, %v838
        %v876 = vadd.f32 %v624, %v841
        %v877 = vadd.f32 %v629, %v846
        %v878 = vadd.f32 %v632, %v849
        %v879 = vadd.f32 %v637, %v854
        %v880 = vadd.f32 %v640, %v857
        %v881 = vadd.f32 %v645, %v862
        %v882 = vadd.f32 %v648, %v865
        %v883 = vadd.f32 %v653, %v870
        %v884 = vld [vmem:[%s304] sm:$0xf]
        %v885 = vld [vmem:[%s304 + $0x4] sm:$0xf]
        %v886 = vld [vmem:[%s304 + $0x8] sm:$0xf]
        %v887 = vld [vmem:[%s304 + $0xc] sm:$0xf]
        %v888 = vld [vmem:[%s304 + $0x10] sm:$0xf]
        %v889 = vld [vmem:[%s304 + $0x14] sm:$0xf]
        %v890 = vld [vmem:[%s304 + $0x18] sm:$0xf]
        %v891 = vld [vmem:[%s304 + $0x1c] sm:$0xf]
        %v892 = vld [vmem:[%s304 + $0x20] sm:$0xf]
        %s893 = scalar_lea.vmem %s4, 192
        %v894 = vld [vmem:[%s893] sm:$0xf]
        %v895 = vld [vmem:[%s893 + $0x4] sm:$0xf]
        %v896 = vld [vmem:[%s893 + $0x8] sm:$0xf]
        %v897 = vld [vmem:[%s893 + $0xc] sm:$0xf]
        %v898 = vld [vmem:[%s893 + $0x10] sm:$0xf]
        %v899 = vld [vmem:[%s893 + $0x14] sm:$0xf]
        %v900 = vld [vmem:[%s893 + $0x18] sm:$0xf]
        %v901 = vld [vmem:[%s893 + $0x1c] sm:$0xf]
        %v902 = vld [vmem:[%s893 + $0x20] sm:$0xf]
        %v903 = vld [vmem:[%s893 + $0x24] sm:$0xf]
        %v904 = vld [vmem:[%s893 + $0x28] sm:$0xf]
        %v905 = vld [vmem:[%s893 + $0x2c] sm:$0xf]
        %v906 = vld [vmem:[%s893 + $0x30] sm:$0xf]
        %v907 = vld [vmem:[%s893 + $0x34] sm:$0xf]
        %v908 = vld [vmem:[%s893 + $0x38] sm:$0xf]
        %v909 = vld [vmem:[%s893 + $0x3c] sm:$0xf]
        %v919 = vunpack.c.l.b16 %v884
        %v920 = vunpack.c.l.b16 %v885
        %v921 = vunpack.c.l.b16 %v886
        %v922 = vunpack.c.l.b16 %v887
        %v923 = vunpack.c.l.b16 %v888
        %v924 = vunpack.c.l.b16 %v889
        %v925 = vunpack.c.l.b16 %v890
        %v926 = vunpack.c.l.b16 %v891
        %v927 = vunpack.c.l.b16 %v892
        %v928 = vpack.c.b16 %v920, %v919
        %v929 = vpack.c.b16 %v922, %v921
        %v930 = vpack.c.b16 %v924, %v923
        %v931 = vpack.c.b16 %v926, %v925
        %v932 = vpack.c.b16 %v927, %v927
        %v954 = vunpack.c.l.b16 %v894
        %v955 = vunpack.c.l.b16 %v895
        %v956 = vunpack.c.l.b16 %v896
        %v957 = vunpack.c.l.b16 %v897
        %v958 = vunpack.c.l.b16 %v898
        %v959 = vunpack.c.l.b16 %v899
        %v960 = vunpack.c.l.b16 %v900
        %v961 = vunpack.c.l.b16 %v901
        %v962 = vunpack.c.l.b16 %v902
        %v963 = vunpack.c.l.b16 %v903
        %v964 = vunpack.c.l.b16 %v904
        %v965 = vunpack.c.l.b16 %v905
        %v966 = vunpack.c.l.b16 %v906
        %v967 = vunpack.c.l.b16 %v907
        %v968 = vunpack.c.l.b16 %v908
        %v969 = vunpack.c.l.b16 %v909
        %v970 = vpack.c.b16 %v955, %v954
        %v971 = vpack.c.b16 %v957, %v956
        %v972 = vpack.c.b16 %v959, %v958
        %v973 = vpack.c.b16 %v961, %v960
        %v974 = vpack.c.b16 %v963, %v962
        %v975 = vpack.c.b16 %v965, %v964
        %v976 = vpack.c.b16 %v967, %v966
        %v977 = vpack.c.b16 %v969, %v968
        %986 = vmatprep.subr.bf16.mxu0 0
        %987 = vmatpush1.bf16.msra.mxu0 %v970
        %988 = vmatprep.subr.bf16.mxu0 0
        %989 = vmatpush1.bf16.msra.mxu0 %v971
        %990 = vmatprep.subr.bf16.mxu0 0
        %991 = vmatpush1.bf16.msra.mxu0 %v972
        %992 = vmatprep.subr.bf16.mxu0 0
        %993 = vmatpush1.bf16.msra.mxu0 %v973
        %994 = vmatprep.subr.bf16.mxu0 0
        %995 = vmatpush1.bf16.msra.mxu0 %v974
        %996 = vmatprep.subr.bf16.mxu0 0
        %997 = vmatpush1.bf16.msra.mxu0 %v975
        %998 = vmatprep.subr.bf16.mxu0 0
        %999 = vmatpush1.bf16.msra.mxu0 %v976
        %1000 = vmatprep.subr.bf16.mxu0 0
        %1001 = vmatpush1.bf16.msra.mxu0 %v977
        %1002 = vmatprep.subr.bf16.mxu0 0
        %1003 = vmatpush1.bf16.msra.mxu0 0
        %1004 = vmatprep.subr.bf16.mxu0 0
        %1005 = vmatpush1.bf16.msra.mxu0 0
        %1006 = vmatprep.subr.bf16.mxu0 0
        %1007 = vmatpush1.bf16.msra.mxu0 0
        %1008 = vmatprep.subr.bf16.mxu0 0
        %1009 = vmatpush1.bf16.msra.mxu0 0
        %1010 = vmatprep.subr.bf16.mxu0 0
        %1011 = vmatpush1.bf16.msra.mxu0 0
        %1012 = vmatprep.subr.bf16.mxu0 0
        %1013 = vmatpush1.bf16.msra.mxu0 0
        %1014 = vmatprep.subr.bf16.mxu0 0
        %1015 = vmatpush1.bf16.msra.mxu0 0
        %1016 = vmatprep.subr.bf16.mxu0 0
        %1017 = vmatpush1.bf16.msra.mxu0 0
        %1018 = vmatprep.mubr.bf16.mxu0 0
        %1019 = vmatmul.mubr.bf16.gmra.mrb[0].mxu0 %v928
        %v1020 = vpop.f32.mrb[0].mxu0
        %v1021 = vadd.f32 0.0, %v1020
        %v1022 = vpop.f32.mrb[0].mxu0
        %v1023 = vpop.f32.mrb[0].mxu0
        %v1024 = vadd.f32 0.0, %v1023
        %v1025 = vpop.f32.mrb[0].mxu0
        %1026 = vmatprep.mubr.bf16.mxu0 0
        %1027 = vmatmul.mubr.bf16.gmra.mrb[0].mxu0 %v929
        %v1028 = vpop.f32.mrb[0].mxu0
        %v1029 = vadd.f32 0.0, %v1028
        %v1030 = vpop.f32.mrb[0].mxu0
        %v1031 = vpop.f32.mrb[0].mxu0
        %v1032 = vadd.f32 0.0, %v1031
        %v1033 = vpop.f32.mrb[0].mxu0
        %1034 = vmatprep.mubr.bf16.mxu0 0
        %1035 = vmatmul.mubr.bf16.gmra.mrb[0].mxu0 %v930
        %v1036 = vpop.f32.mrb[0].mxu0
        %v1037 = vadd.f32 0.0, %v1036
        %v1038 = vpop.f32.mrb[0].mxu0
        %v1039 = vpop.f32.mrb[0].mxu0
        %v1040 = vadd.f32 0.0, %v1039
        %v1041 = vpop.f32.mrb[0].mxu0
        %1042 = vmatprep.mubr.bf16.mxu0 0
        %1043 = vmatmul.mubr.bf16.gmra.mrb[0].mxu0 %v931
        %v1044 = vpop.f32.mrb[0].mxu0
        %v1045 = vadd.f32 0.0, %v1044
        %v1046 = vpop.f32.mrb[0].mxu0
        %v1047 = vpop.f32.mrb[0].mxu0
        %v1048 = vadd.f32 0.0, %v1047
        %v1049 = vpop.f32.mrb[0].mxu0
        %1050 = vmatprep.mubr.bf16.mxu0 0
        %1051 = vmatmul.mubr.bf16.gmra.mrb[0].mxu0 %v932
        %v1052 = vpop.f32.mrb[0].mxu0
        %v1053 = vadd.f32 0.0, %v1052
        %v1054 = vpop.f32.mrb[0].mxu0
        %v1055 = vpop.f32.mrb[0].mxu0
        %v1056 = vpop.f32.mrb[0].mxu0
        %1057 = vdwg.mxu0
        %v1058 = vadd.f32 %v875, %v1021
        %v1059 = vadd.f32 %v876, %v1024
        %v1060 = vadd.f32 %v877, %v1029
        %v1061 = vadd.f32 %v878, %v1032
        %v1062 = vadd.f32 %v879, %v1037
        %v1063 = vadd.f32 %v880, %v1040
        %v1064 = vadd.f32 %v881, %v1045
        %v1065 = vadd.f32 %v882, %v1048
        %v1066 = vadd.f32 %v883, %v1053
        %v1067 = vld [vmem:[%s309] sm:$0xf]
        %v1068 = vld [vmem:[%s309 + $0x4] sm:$0xf]
        %v1069 = vld [vmem:[%s309 + $0x8] sm:$0xf]
        %v1070 = vld [vmem:[%s309 + $0xc] sm:$0xf]
        %v1071 = vld [vmem:[%s309 + $0x10] sm:$0xf]
        %v1072 = vld [vmem:[%s309 + $0x14] sm:$0xf]
        %v1073 = vld [vmem:[%s309 + $0x18] sm:$0xf]
        %v1074 = vld [vmem:[%s309 + $0x1c] sm:$0xf]
        %v1075 = vld [vmem:[%s309 + $0x20] sm:$0xf]
        %s1076 = scalar_lea.vmem %s4, 256
        %v1077 = vld [vmem:[%s1076] sm:$0xf]
        %v1078 = vld [vmem:[%s1076 + $0x4] sm:$0xf]
        %v1079 = vld [vmem:[%s1076 + $0x8] sm:$0xf]
        %v1080 = vld [vmem:[%s1076 + $0xc] sm:$0xf]
        %v1081 = vld [vmem:[%s1076 + $0x10] sm:$0xf]
        %v1082 = vld [vmem:[%s1076 + $0x14] sm:$0xf]
        %v1083 = vld [vmem:[%s1076 + $0x18] sm:$0xf]
        %v1084 = vld [vmem:[%s1076 + $0x1c] sm:$0xf]
        %v1085 = vld [vmem:[%s1076 + $0x20] sm:$0xf]
        %v1086 = vld [vmem:[%s1076 + $0x24] sm:$0xf]
        %v1087 = vld [vmem:[%s1076 + $0x28] sm:$0xf]
        %v1088 = vld [vmem:[%s1076 + $0x2c] sm:$0xf]
        %v1089 = vld [vmem:[%s1076 + $0x30] sm:$0xf]
        %v1090 = vld [vmem:[%s1076 + $0x34] sm:$0xf]
        %v1091 = vld [vmem:[%s1076 + $0x38] sm:$0xf]
        %v1092 = vld [vmem:[%s1076 + $0x3c] sm:$0xf]
        %v1102 = vunpack.c.l.b16 %v1067
        %v1103 = vunpack.c.l.b16 %v1068
        %v1104 = vunpack.c.l.b16 %v1069
        %v1105 = vunpack.c.l.b16 %v1070
        %v1106 = vunpack.c.l.b16 %v1071
        %v1107 = vunpack.c.l.b16 %v1072
        %v1108 = vunpack.c.l.b16 %v1073
        %v1109 = vunpack.c.l.b16 %v1074
        %v1110 = vunpack.c.l.b16 %v1075
        %v1111 = vpack.c.b16 %v1103, %v1102
        %v1112 = vpack.c.b16 %v1105, %v1104
        %v1113 = vpack.c.b16 %v1107, %v1106
        %v1114 = vpack.c.b16 %v1109, %v1108
        %v1115 = vpack.c.b16 %v1110, %v1110
        %v1137 = vunpack.c.l.b16 %v1077
        %v1138 = vunpack.c.l.b16 %v1078
        %v1139 = vunpack.c.l.b16 %v1079
        %v1140 = vunpack.c.l.b16 %v1080
        %v1141 = vunpack.c.l.b16 %v1081
        %v1142 = vunpack.c.l.b16 %v1082
        %v1143 = vunpack.c.l.b16 %v1083
        %v1144 = vunpack.c.l.b16 %v1084
        %v1145 = vunpack.c.l.b16 %v1085
        %v1146 = vunpack.c.l.b16 %v1086
        %v1147 = vunpack.c.l.b16 %v1087
        %v1148 = vunpack.c.l.b16 %v1088
        %v1149 = vunpack.c.l.b16 %v1089
        %v1150 = vunpack.c.l.b16 %v1090
        %v1151 = vunpack.c.l.b16 %v1091
        %v1152 = vunpack.c.l.b16 %v1092
        %v1153 = vpack.c.b16 %v1138, %v1137
        %v1154 = vpack.c.b16 %v1140, %v1139
        %v1155 = vpack.c.b16 %v1142, %v1141
        %v1156 = vpack.c.b16 %v1144, %v1143
        %v1157 = vpack.c.b16 %v1146, %v1145
        %v1158 = vpack.c.b16 %v1148, %v1147
        %v1159 = vpack.c.b16 %v1150, %v1149
        %v1160 = vpack.c.b16 %v1152, %v1151
        %1169 = vmatprep.subr.bf16.mxu0 0
        %1170 = vmatpush1.bf16.msra.mxu0 %v1153
        %1171 = vmatprep.subr.bf16.mxu0 0
        %1172 = vmatpush1.bf16.msra.mxu0 %v1154
        %1173 = vmatprep.subr.bf16.mxu0 0
        %1174 = vmatpush1.bf16.msra.mxu0 %v1155
        %1175 = vmatprep.subr.bf16.mxu0 0
        %1176 = vmatpush1.bf16.msra.mxu0 %v1156
        %1177 = vmatprep.subr.bf16.mxu0 0
        %1178 = vmatpush1.bf16.msra.mxu0 %v1157
        %1179 = vmatprep.subr.bf16.mxu0 0
        %1180 = vmatpush1.bf16.msra.mxu0 %v1158
        %1181 = vmatprep.subr.bf16.mxu0 0
        %1182 = vmatpush1.bf16.msra.mxu0 %v1159
        %1183 = vmatprep.subr.bf16.mxu0 0
        %1184 = vmatpush1.bf16.msra.mxu0 %v1160
        %1185 = vmatprep.subr.bf16.mxu0 0
        %1186 = vmatpush1.bf16.msra.mxu0 0
        %1187 = vmatprep.subr.bf16.mxu0 0
        %1188 = vmatpush1.bf16.msra.mxu0 0
        %1189 = vmatprep.subr.bf16.mxu0 0
        %1190 = vmatpush1.bf16.msra.mxu0 0
        %1191 = vmatprep.subr.bf16.mxu0 0
        %1192 = vmatpush1.bf16.msra.mxu0 0
        %1193 = vmatprep.subr.bf16.mxu0 0
        %1194 = vmatpush1.bf16.msra.mxu0 0
        %1195 = vmatprep.subr.bf16.mxu0 0
        %1196 = vmatpush1.bf16.msra.mxu0 0
        %1197 = vmatprep.subr.bf16.mxu0 0
        %1198 = vmatpush1.bf16.msra.mxu0 0
        %1199 = vmatprep.subr.bf16.mxu0 0
        %1200 = vmatpush1.bf16.msra.mxu0 0
        %1201 = vmatprep.mubr.bf16.mxu0 0
        %1202 = vmatmul.mubr.bf16.gmra.mrb[0].mxu0 %v1111
        %v1203 = vpop.f32.mrb[0].mxu0
        %v1204 = vadd.f32 0.0, %v1203
        %v1205 = vpop.f32.mrb[0].mxu0
        %v1206 = vpop.f32.mrb[0].mxu0
        %v1207 = vadd.f32 0.0, %v1206
        %v1208 = vpop.f32.mrb[0].mxu0
        %1209 = vmatprep.mubr.bf16.mxu0 0
        %1210 = vmatmul.mubr.bf16.gmra.mrb[0].mxu0 %v1112
        %v1211 = vpop.f32.mrb[0].mxu0
        %v1212 = vadd.f32 0.0, %v1211
        %v1213 = vpop.f32.mrb[0].mxu0
        %v1214 = vpop.f32.mrb[0].mxu0
        %v1215 = vadd.f32 0.0, %v1214
        %v1216 = vpop.f32.mrb[0].mxu0
        %1217 = vmatprep.mubr.bf16.mxu0 0
        %1218 = vmatmul.mubr.bf16.gmra.mrb[0].mxu0 %v1113
        %v1219 = vpop.f32.mrb[0].mxu0
        %v1220 = vadd.f32 0.0, %v1219
        %v1221 = vpop.f32.mrb[0].mxu0
        %v1222 = vpop.f32.mrb[0].mxu0
        %v1223 = vadd.f32 0.0, %v1222
        %v1224 = vpop.f32.mrb[0].mxu0
        %1225 = vmatprep.mubr.bf16.mxu0 0
        %1226 = vmatmul.mubr.bf16.gmra.mrb[0].mxu0 %v1114
        %v1227 = vpop.f32.mrb[0].mxu0
        %v1228 = vadd.f32 0.0, %v1227
        %v1229 = vpop.f32.mrb[0].mxu0
        %v1230 = vpop.f32.mrb[0].mxu0
        %v1231 = vadd.f32 0.0, %v1230
        %v1232 = vpop.f32.mrb[0].mxu0
        %1233 = vmatprep.mubr.bf16.mxu0 0
        %1234 = vmatmul.mubr.bf16.gmra.mrb[0].mxu0 %v1115
        %v1235 = vpop.f32.mrb[0].mxu0
        %v1236 = vadd.f32 0.0, %v1235
        %v1237 = vpop.f32.mrb[0].mxu0
        %v1238 = vpop.f32.mrb[0].mxu0
        %v1239 = vpop.f32.mrb[0].mxu0
        %1240 = vdwg.mxu0
        %v1241 = vadd.f32 %v1058, %v1204
        %v1242 = vadd.f32 %v1059, %v1207
        %v1243 = vadd.f32 %v1060, %v1212
        %v1244 = vadd.f32 %v1061, %v1215
        %v1245 = vadd.f32 %v1062, %v1220
        %v1246 = vadd.f32 %v1063, %v1223
        %v1247 = vadd.f32 %v1064, %v1228
        %v1248 = vadd.f32 %v1065, %v1231
        %v1249 = vadd.f32 %v1066, %v1236
        %v1250 = vld [vmem:[%s304] sm:$0xf]
        %v1251 = vld [vmem:[%s304 + $0x4] sm:$0xf]
        %v1252 = vld [vmem:[%s304 + $0x8] sm:$0xf]
        %v1253 = vld [vmem:[%s304 + $0xc] sm:$0xf]
        %v1254 = vld [vmem:[%s304 + $0x10] sm:$0xf]
        %v1255 = vld [vmem:[%s304 + $0x14] sm:$0xf]
        %v1256 = vld [vmem:[%s304 + $0x18] sm:$0xf]
        %v1257 = vld [vmem:[%s304 + $0x1c] sm:$0xf]
        %v1258 = vld [vmem:[%s304 + $0x20] sm:$0xf]
        %v1259 = vld [vmem:[%s304 + $0x24] sm:$0x1]
        %s1260 = scalar_lea.vmem %s4, 320
        %v1261 = vld [vmem:[%s1260] sm:$0xf]
        %v1262 = vld [vmem:[%s1260 + $0x4] sm:$0xf]
        %v1263 = vld [vmem:[%s1260 + $0x8] sm:$0xf]
        %v1264 = vld [vmem:[%s1260 + $0xc] sm:$0xf]
        %v1265 = vld [vmem:[%s1260 + $0x10] sm:$0xf]
        %v1266 = vld [vmem:[%s1260 + $0x14] sm:$0xf]
        %v1267 = vld [vmem:[%s1260 + $0x18] sm:$0xf]
        %v1268 = vld [vmem:[%s1260 + $0x1c] sm:$0xf]
        %v1269 = vld [vmem:[%s1260 + $0x20] sm:$0xf]
        %v1270 = vld [vmem:[%s1260 + $0x24] sm:$0xf]
        %v1271 = vld [vmem:[%s1260 + $0x28] sm:$0xf]
        %v1272 = vld [vmem:[%s1260 + $0x2c] sm:$0xf]
        %v1273 = vld [vmem:[%s1260 + $0x30] sm:$0xf]
        %v1274 = vld [vmem:[%s1260 + $0x34] sm:$0xf]
        %v1275 = vld [vmem:[%s1260 + $0x38] sm:$0xf]
        %v1276 = vld [vmem:[%s1260 + $0x3c] sm:$0xf]
        %v1287 = vunpack.c.l.b16 %v1250
        %v1288 = vunpack.c.l.b16 %v1251
        %v1289 = vunpack.c.l.b16 %v1252
        %v1290 = vunpack.c.l.b16 %v1253
        %v1291 = vunpack.c.l.b16 %v1254
        %v1292 = vunpack.c.l.b16 %v1255
        %v1293 = vunpack.c.l.b16 %v1256
        %v1294 = vunpack.c.l.b16 %v1257
        %v1295 = vunpack.c.l.b16 %v1258
        %v1296 = vunpack.c.l.b16 %v1259
        %v1297 = vpack.c.b16 %v1288, %v1287
        %v1298 = vpack.c.b16 %v1290, %v1289
        %v1299 = vpack.c.b16 %v1292, %v1291
        %v1300 = vpack.c.b16 %v1294, %v1293
        %v1301 = vpack.c.b16 %v1296, %v1295
        %v1303 = vshrl.u32 %v1297, 16
        %v1305 = vshll.u32 %v1297, 16
        %v1307 = vrot.slane %v1305, 1
        %v1308 = vor.u32 %v1303, %v1307
        %v1310 = vshll.u32 %v1298, 16
        %v1312 = vrot.slane %v1310, 1
        %v1313 = vsel %vm710, %v1308, %v1312
        %v1314 = vshrl.u32 %v1298, 16
        %v1316 = vor.u32 %v1314, %v1312
        %v1318 = vshll.u32 %v1299, 16
        %v1320 = vrot.slane %v1318, 1
        %v1321 = vsel %vm710, %v1316, %v1320
        %v1322 = vshrl.u32 %v1299, 16
        %v1324 = vor.u32 %v1322, %v1320
        %v1326 = vshll.u32 %v1300, 16
        %v1328 = vrot.slane %v1326, 1
        %v1329 = vsel %vm710, %v1324, %v1328
        %v1330 = vshrl.u32 %v1300, 16
        %v1332 = vor.u32 %v1330, %v1328
        %v1334 = vshll.u32 %v1301, 16
        %v1336 = vrot.slane %v1334, 1
        %v1337 = vsel %vm710, %v1332, %v1336
        %v1338 = vshrl.u32 %v1301, 16
        %v1340 = vor.u32 %v1338, %v1336
        %v1362 = vunpack.c.l.b16 %v1261
        %v1363 = vunpack.c.l.b16 %v1262
        %v1364 = vunpack.c.l.b16 %v1263
        %v1365 = vunpack.c.l.b16 %v1264
        %v1366 = vunpack.c.l.b16 %v1265
        %v1367 = vunpack.c.l.b16 %v1266
        %v1368 = vunpack.c.l.b16 %v1267
        %v1369 = vunpack.c.l.b16 %v1268
        %v1370 = vunpack.c.l.b16 %v1269
        %v1371 = vunpack.c.l.b16 %v1270
        %v1372 = vunpack.c.l.b16 %v1271
        %v1373 = vunpack.c.l.b16 %v1272
        %v1374 = vunpack.c.l.b16 %v1273
        %v1375 = vunpack.c.l.b16 %v1274
        %v1376 = vunpack.c.l.b16 %v1275
        %v1377 = vunpack.c.l.b16 %v1276
        %v1378 = vpack.c.b16 %v1363, %v1362
        %v1379 = vpack.c.b16 %v1365, %v1364
        %v1380 = vpack.c.b16 %v1367, %v1366
        %v1381 = vpack.c.b16 %v1369, %v1368
        %v1382 = vpack.c.b16 %v1371, %v1370
        %v1383 = vpack.c.b16 %v1373, %v1372
        %v1384 = vpack.c.b16 %v1375, %v1374
        %v1385 = vpack.c.b16 %v1377, %v1376
        %1394 = vmatprep.subr.bf16.mxu0 0
        %1395 = vmatpush1.bf16.msra.mxu0 %v1378
        %1396 = vmatprep.subr.bf16.mxu0 0
        %1397 = vmatpush1.bf16.msra.mxu0 %v1379
        %1398 = vmatprep.subr.bf16.mxu0 0
        %1399 = vmatpush1.bf16.msra.mxu0 %v1380
        %1400 = vmatprep.subr.bf16.mxu0 0
        %1401 = vmatpush1.bf16.msra.mxu0 %v1381
        %1402 = vmatprep.subr.bf16.mxu0 0
        %1403 = vmatpush1.bf16.msra.mxu0 %v1382
        %1404 = vmatprep.subr.bf16.mxu0 0
        %1405 = vmatpush1.bf16.msra.mxu0 %v1383
        %1406 = vmatprep.subr.bf16.mxu0 0
        %1407 = vmatpush1.bf16.msra.mxu0 %v1384
        %1408 = vmatprep.subr.bf16.mxu0 0
        %1409 = vmatpush1.bf16.msra.mxu0 %v1385
        %1410 = vmatprep.subr.bf16.mxu0 0
        %1411 = vmatpush1.bf16.msra.mxu0 0
        %1412 = vmatprep.subr.bf16.mxu0 0
        %1413 = vmatpush1.bf16.msra.mxu0 0
        %1414 = vmatprep.subr.bf16.mxu0 0
        %1415 = vmatpush1.bf16.msra.mxu0 0
        %1416 = vmatprep.subr.bf16.mxu0 0
        %1417 = vmatpush1.bf16.msra.mxu0 0
        %1418 = vmatprep.subr.bf16.mxu0 0
        %1419 = vmatpush1.bf16.msra.mxu0 0
        %1420 = vmatprep.subr.bf16.mxu0 0
        %1421 = vmatpush1.bf16.msra.mxu0 0
        %1422 = vmatprep.subr.bf16.mxu0 0
        %1423 = vmatpush1.bf16.msra.mxu0 0
        %1424 = vmatprep.subr.bf16.mxu0 0
        %1425 = vmatpush1.bf16.msra.mxu0 0
        %1426 = vmatprep.mubr.bf16.mxu0 0
        %1427 = vmatmul.mubr.bf16.gmra.mrb[0].mxu0 %v1313
        %v1428 = vpop.f32.mrb[0].mxu0
        %v1429 = vadd.f32 0.0, %v1428
        %v1430 = vpop.f32.mrb[0].mxu0
        %v1431 = vpop.f32.mrb[0].mxu0
        %v1432 = vadd.f32 0.0, %v1431
        %v1433 = vpop.f32.mrb[0].mxu0
        %1434 = vmatprep.mubr.bf16.mxu0 0
        %1435 = vmatmul.mubr.bf16.gmra.mrb[0].mxu0 %v1321
        %v1436 = vpop.f32.mrb[0].mxu0
        %v1437 = vadd.f32 0.0, %v1436
        %v1438 = vpop.f32.mrb[0].mxu0
        %v1439 = vpop.f32.mrb[0].mxu0
        %v1440 = vadd.f32 0.0, %v1439
        %v1441 = vpop.f32.mrb[0].mxu0
        %1442 = vmatprep.mubr.bf16.mxu0 0
        %1443 = vmatmul.mubr.bf16.gmra.mrb[0].mxu0 %v1329
        %v1444 = vpop.f32.mrb[0].mxu0
        %v1445 = vadd.f32 0.0, %v1444
        %v1446 = vpop.f32.mrb[0].mxu0
        %v1447 = vpop.f32.mrb[0].mxu0
        %v1448 = vadd.f32 0.0, %v1447
        %v1449 = vpop.f32.mrb[0].mxu0
        %1450 = vmatprep.mubr.bf16.mxu0 0
        %1451 = vmatmul.mubr.bf16.gmra.mrb[0].mxu0 %v1337
        %v1452 = vpop.f32.mrb[0].mxu0
        %v1453 = vadd.f32 0.0, %v1452
        %v1454 = vpop.f32.mrb[0].mxu0
        %v1455 = vpop.f32.mrb[0].mxu0
        %v1456 = vadd.f32 0.0, %v1455
        %v1457 = vpop.f32.mrb[0].mxu0
        %1458 = vmatprep.mubr.bf16.mxu0 0
        %1459 = vmatmul.mubr.bf16.gmra.mrb[0].mxu0 %v1340
        %v1460 = vpop.f32.mrb[0].mxu0
        %v1461 = vadd.f32 0.0, %v1460
        %v1462 = vpop.f32.mrb[0].mxu0
        %v1463 = vpop.f32.mrb[0].mxu0
        %v1464 = vpop.f32.mrb[0].mxu0
        %1465 = vdwg.mxu0
        %v1466 = vadd.f32 %v1241, %v1429
        %v1467 = vadd.f32 %v1242, %v1432
        %v1468 = vadd.f32 %v1243, %v1437
        %v1469 = vadd.f32 %v1244, %v1440
        %v1470 = vadd.f32 %v1245, %v1445
        %v1471 = vadd.f32 %v1246, %v1448
        %v1472 = vadd.f32 %v1247, %v1453
        %v1473 = vadd.f32 %v1248, %v1456
        %v1474 = vadd.f32 %v1249, %v1461
        %v1475 = vld [vmem:[%s294 + $0x4] sm:$0xf]
        %v1476 = vld [vmem:[%s294 + $0x8] sm:$0xf]
        %v1477 = vld [vmem:[%s294 + $0xc] sm:$0xf]
        %v1478 = vld [vmem:[%s294 + $0x10] sm:$0xf]
        %v1479 = vld [vmem:[%s294 + $0x14] sm:$0xf]
        %v1480 = vld [vmem:[%s294 + $0x18] sm:$0xf]
        %v1481 = vld [vmem:[%s294 + $0x1c] sm:$0xf]
        %v1482 = vld [vmem:[%s294 + $0x20] sm:$0xf]
        %v1483 = vld [vmem:[%s294 + $0x24] sm:$0xf]
        %v1484 = vld [vmem:[%s294 + $0x28] sm:$0x1]
        %s1485 = scalar_lea.vmem %s4, 384
        %v1486 = vld [vmem:[%s1485] sm:$0xf]
        %v1487 = vld [vmem:[%s1485 + $0x4] sm:$0xf]
        %v1488 = vld [vmem:[%s1485 + $0x8] sm:$0xf]
        %v1489 = vld [vmem:[%s1485 + $0xc] sm:$0xf]
        %v1490 = vld [vmem:[%s1485 + $0x10] sm:$0xf]
        %v1491 = vld [vmem:[%s1485 + $0x14] sm:$0xf]
        %v1492 = vld [vmem:[%s1485 + $0x18] sm:$0xf]
        %v1493 = vld [vmem:[%s1485 + $0x1c] sm:$0xf]
        %v1494 = vld [vmem:[%s1485 + $0x20] sm:$0xf]
        %v1495 = vld [vmem:[%s1485 + $0x24] sm:$0xf]
        %v1496 = vld [vmem:[%s1485 + $0x28] sm:$0xf]
        %v1497 = vld [vmem:[%s1485 + $0x2c] sm:$0xf]
        %v1498 = vld [vmem:[%s1485 + $0x30] sm:$0xf]
        %v1499 = vld [vmem:[%s1485 + $0x34] sm:$0xf]
        %v1500 = vld [vmem:[%s1485 + $0x38] sm:$0xf]
        %v1501 = vld [vmem:[%s1485 + $0x3c] sm:$0xf]
        %v1512 = vunpack.c.l.b16 %v1475
        %v1513 = vunpack.c.l.b16 %v1476
        %v1514 = vunpack.c.l.b16 %v1477
        %v1515 = vunpack.c.l.b16 %v1478
        %v1516 = vunpack.c.l.b16 %v1479
        %v1517 = vunpack.c.l.b16 %v1480
        %v1518 = vunpack.c.l.b16 %v1481
        %v1519 = vunpack.c.l.b16 %v1482
        %v1520 = vunpack.c.l.b16 %v1483
        %v1521 = vunpack.c.l.b16 %v1484
        %v1522 = vpack.c.b16 %v1513, %v1512
        %v1523 = vpack.c.b16 %v1515, %v1514
        %v1524 = vpack.c.b16 %v1517, %v1516
        %v1525 = vpack.c.b16 %v1519, %v1518
        %v1526 = vpack.c.b16 %v1521, %v1520
        %v1528 = vshrl.u32 %v1522, 16
        %v1530 = vshll.u32 %v1522, 16
        %v1532 = vrot.slane %v1530, 1
        %v1533 = vor.u32 %v1528, %v1532
        %v1535 = vshll.u32 %v1523, 16
        %v1537 = vrot.slane %v1535, 1
        %v1538 = vsel %vm710, %v1533, %v1537
        %v1539 = vshrl.u32 %v1523, 16
        %v1541 = vor.u32 %v1539, %v1537
        %v1543 = vshll.u32 %v1524, 16
        %v1545 = vrot.slane %v1543, 1
        %v1546 = vsel %vm710, %v1541, %v1545
        %v1547 = vshrl.u32 %v1524, 16
        %v1549 = vor.u32 %v1547, %v1545
        %v1551 = vshll.u32 %v1525, 16
        %v1553 = vrot.slane %v1551, 1
        %v1554 = vsel %vm710, %v1549, %v1553
        %v1555 = vshrl.u32 %v1525, 16
        %v1557 = vor.u32 %v1555, %v1553
        %v1559 = vshll.u32 %v1526, 16
        %v1561 = vrot.slane %v1559, 1
        %v1562 = vsel %vm710, %v1557, %v1561
        %v1563 = vshrl.u32 %v1526, 16
        %v1565 = vor.u32 %v1563, %v1561
        %v1587 = vunpack.c.l.b16 %v1486
        %v1588 = vunpack.c.l.b16 %v1487
        %v1589 = vunpack.c.l.b16 %v1488
        %v1590 = vunpack.c.l.b16 %v1489
        %v1591 = vunpack.c.l.b16 %v1490
        %v1592 = vunpack.c.l.b16 %v1491
        %v1593 = vunpack.c.l.b16 %v1492
        %v1594 = vunpack.c.l.b16 %v1493
        %v1595 = vunpack.c.l.b16 %v1494
        %v1596 = vunpack.c.l.b16 %v1495
        %v1597 = vunpack.c.l.b16 %v1496
        %v1598 = vunpack.c.l.b16 %v1497
        %v1599 = vunpack.c.l.b16 %v1498
        %v1600 = vunpack.c.l.b16 %v1499
        %v1601 = vunpack.c.l.b16 %v1500
        %v1602 = vunpack.c.l.b16 %v1501
        %v1603 = vpack.c.b16 %v1588, %v1587
        %v1604 = vpack.c.b16 %v1590, %v1589
        %v1605 = vpack.c.b16 %v1592, %v1591
        %v1606 = vpack.c.b16 %v1594, %v1593
        %v1607 = vpack.c.b16 %v1596, %v1595
        %v1608 = vpack.c.b16 %v1598, %v1597
        %v1609 = vpack.c.b16 %v1600, %v1599
        %v1610 = vpack.c.b16 %v1602, %v1601
        %1619 = vmatprep.subr.bf16.mxu0 0
        %1620 = vmatpush1.bf16.msra.mxu0 %v1603
        %1621 = vmatprep.subr.bf16.mxu0 0
        %1622 = vmatpush1.bf16.msra.mxu0 %v1604
        %1623 = vmatprep.subr.bf16.mxu0 0
        %1624 = vmatpush1.bf16.msra.mxu0 %v1605
        %1625 = vmatprep.subr.bf16.mxu0 0
        %1626 = vmatpush1.bf16.msra.mxu0 %v1606
        %1627 = vmatprep.subr.bf16.mxu0 0
        %1628 = vmatpush1.bf16.msra.mxu0 %v1607
        %1629 = vmatprep.subr.bf16.mxu0 0
        %1630 = vmatpush1.bf16.msra.mxu0 %v1608
        %1631 = vmatprep.subr.bf16.mxu0 0
        %1632 = vmatpush1.bf16.msra.mxu0 %v1609
        %1633 = vmatprep.subr.bf16.mxu0 0
        %1634 = vmatpush1.bf16.msra.mxu0 %v1610
        %1635 = vmatprep.subr.bf16.mxu0 0
        %1636 = vmatpush1.bf16.msra.mxu0 0
        %1637 = vmatprep.subr.bf16.mxu0 0
        %1638 = vmatpush1.bf16.msra.mxu0 0
        %1639 = vmatprep.subr.bf16.mxu0 0
        %1640 = vmatpush1.bf16.msra.mxu0 0
        %1641 = vmatprep.subr.bf16.mxu0 0
        %1642 = vmatpush1.bf16.msra.mxu0 0
        %1643 = vmatprep.subr.bf16.mxu0 0
        %1644 = vmatpush1.bf16.msra.mxu0 0
        %1645 = vmatprep.subr.bf16.mxu0 0
        %1646 = vmatpush1.bf16.msra.mxu0 0
        %1647 = vmatprep.subr.bf16.mxu0 0
        %1648 = vmatpush1.bf16.msra.mxu0 0
        %1649 = vmatprep.subr.bf16.mxu0 0
        %1650 = vmatpush1.bf16.msra.mxu0 0
        %1651 = vmatprep.mubr.bf16.mxu0 0
        %1652 = vmatmul.mubr.bf16.gmra.mrb[0].mxu0 %v1538
        %v1653 = vpop.f32.mrb[0].mxu0
        %v1654 = vadd.f32 0.0, %v1653
        %v1655 = vpop.f32.mrb[0].mxu0
        %v1656 = vpop.f32.mrb[0].mxu0
        %v1657 = vadd.f32 0.0, %v1656
        %v1658 = vpop.f32.mrb[0].mxu0
        %1659 = vmatprep.mubr.bf16.mxu0 0
        %1660 = vmatmul.mubr.bf16.gmra.mrb[0].mxu0 %v1546
        %v1661 = vpop.f32.mrb[0].mxu0
        %v1662 = vadd.f32 0.0, %v1661
        %v1663 = vpop.f32.mrb[0].mxu0
        %v1664 = vpop.f32.mrb[0].mxu0
        %v1665 = vadd.f32 0.0, %v1664
        %v1666 = vpop.f32.mrb[0].mxu0
        %1667 = vmatprep.mubr.bf16.mxu0 0
        %1668 = vmatmul.mubr.bf16.gmra.mrb[0].mxu0 %v1554
        %v1669 = vpop.f32.mrb[0].mxu0
        %v1670 = vadd.f32 0.0, %v1669
        %v1671 = vpop.f32.mrb[0].mxu0
        %v1672 = vpop.f32.mrb[0].mxu0
        %v1673 = vadd.f32 0.0, %v1672
        %v1674 = vpop.f32.mrb[0].mxu0
        %1675 = vmatprep.mubr.bf16.mxu0 0
        %1676 = vmatmul.mubr.bf16.gmra.mrb[0].mxu0 %v1562
        %v1677 = vpop.f32.mrb[0].mxu0
        %v1678 = vadd.f32 0.0, %v1677
        %v1679 = vpop.f32.mrb[0].mxu0
        %v1680 = vpop.f32.mrb[0].mxu0
        %v1681 = vadd.f32 0.0, %v1680
        %v1682 = vpop.f32.mrb[0].mxu0
        %1683 = vmatprep.mubr.bf16.mxu0 0
        %1684 = vmatmul.mubr.bf16.gmra.mrb[0].mxu0 %v1565
        %v1685 = vpop.f32.mrb[0].mxu0
        %v1686 = vadd.f32 0.0, %v1685
        %v1687 = vpop.f32.mrb[0].mxu0
        %v1688 = vpop.f32.mrb[0].mxu0
        %v1689 = vpop.f32.mrb[0].mxu0
        %1690 = vdwg.mxu0
        %v1691 = vadd.f32 %v1466, %v1654
        %v1692 = vadd.f32 %v1467, %v1657
        %v1693 = vadd.f32 %v1468, %v1662
        %v1694 = vadd.f32 %v1469, %v1665
        %v1695 = vadd.f32 %v1470, %v1670
        %v1696 = vadd.f32 %v1471, %v1673
        %v1697 = vadd.f32 %v1472, %v1678
        %v1698 = vadd.f32 %v1473, %v1681
        %v1699 = vadd.f32 %v1474, %v1686
        %v1700 = vld [vmem:[%s299 + $0x4] sm:$0xf]
        %v1701 = vld [vmem:[%s299 + $0x8] sm:$0xf]
        %v1702 = vld [vmem:[%s299 + $0xc] sm:$0xf]
        %v1703 = vld [vmem:[%s299 + $0x10] sm:$0xf]
        %v1704 = vld [vmem:[%s299 + $0x14] sm:$0xf]
        %v1705 = vld [vmem:[%s299 + $0x18] sm:$0xf]
        %v1706 = vld [vmem:[%s299 + $0x1c] sm:$0xf]
        %v1707 = vld [vmem:[%s299 + $0x20] sm:$0xf]
        %v1708 = vld [vmem:[%s299 + $0x24] sm:$0xf]
        %v1709 = vld [vmem:[%s299 + $0x28] sm:$0x1]
        %s1710 = scalar_lea.vmem %s4, 448
        %v1711 = vld [vmem:[%s1710] sm:$0xf]
        %v1712 = vld [vmem:[%s1710 + $0x4] sm:$0xf]
        %v1713 = vld [vmem:[%s1710 + $0x8] sm:$0xf]
        %v1714 = vld [vmem:[%s1710 + $0xc] sm:$0xf]
        %v1715 = vld [vmem:[%s1710 + $0x10] sm:$0xf]
        %v1716 = vld [vmem:[%s1710 + $0x14] sm:$0xf]
        %v1717 = vld [vmem:[%s1710 + $0x18] sm:$0xf]
        %v1718 = vld [vmem:[%s1710 + $0x1c] sm:$0xf]
        %v1719 = vld [vmem:[%s1710 + $0x20] sm:$0xf]
        %v1720 = vld [vmem:[%s1710 + $0x24] sm:$0xf]
        %v1721 = vld [vmem:[%s1710 + $0x28] sm:$0xf]
        %v1722 = vld [vmem:[%s1710 + $0x2c] sm:$0xf]
        %v1723 = vld [vmem:[%s1710 + $0x30] sm:$0xf]
        %v1724 = vld [vmem:[%s1710 + $0x34] sm:$0xf]
        %v1725 = vld [vmem:[%s1710 + $0x38] sm:$0xf]
        %v1726 = vld [vmem:[%s1710 + $0x3c] sm:$0xf]
        %v1737 = vunpack.c.l.b16 %v1700
        %v1738 = vunpack.c.l.b16 %v1701
        %v1739 = vunpack.c.l.b16 %v1702
        %v1740 = vunpack.c.l.b16 %v1703
        %v1741 = vunpack.c.l.b16 %v1704
        %v1742 = vunpack.c.l.b16 %v1705
        %v1743 = vunpack.c.l.b16 %v1706
        %v1744 = vunpack.c.l.b16 %v1707
        %v1745 = vunpack.c.l.b16 %v1708
        %v1746 = vunpack.c.l.b16 %v1709
        %v1747 = vpack.c.b16 %v1738, %v1737
        %v1748 = vpack.c.b16 %v1740, %v1739
        %v1749 = vpack.c.b16 %v1742, %v1741
        %v1750 = vpack.c.b16 %v1744, %v1743
        %v1751 = vpack.c.b16 %v1746, %v1745
        %v1753 = vshrl.u32 %v1747, 16
        %v1755 = vshll.u32 %v1747, 16
        %v1757 = vrot.slane %v1755, 1
        %v1758 = vor.u32 %v1753, %v1757
        %v1760 = vshll.u32 %v1748, 16
        %v1762 = vrot.slane %v1760, 1
        %v1763 = vsel %vm710, %v1758, %v1762
        %v1764 = vshrl.u32 %v1748, 16
        %v1766 = vor.u32 %v1764, %v1762
        %v1768 = vshll.u32 %v1749, 16
        %v1770 = vrot.slane %v1768, 1
        %v1771 = vsel %vm710, %v1766, %v1770
        %v1772 = vshrl.u32 %v1749, 16
        %v1774 = vor.u32 %v1772, %v1770
        %v1776 = vshll.u32 %v1750, 16
        %v1778 = vrot.slane %v1776, 1
        %v1779 = vsel %vm710, %v1774, %v1778
        %v1780 = vshrl.u32 %v1750, 16
        %v1782 = vor.u32 %v1780, %v1778
        %v1784 = vshll.u32 %v1751, 16
        %v1786 = vrot.slane %v1784, 1
        %v1787 = vsel %vm710, %v1782, %v1786
        %v1788 = vshrl.u32 %v1751, 16
        %v1790 = vor.u32 %v1788, %v1786
        %v1812 = vunpack.c.l.b16 %v1711
        %v1813 = vunpack.c.l.b16 %v1712
        %v1814 = vunpack.c.l.b16 %v1713
        %v1815 = vunpack.c.l.b16 %v1714
        %v1816 = vunpack.c.l.b16 %v1715
        %v1817 = vunpack.c.l.b16 %v1716
        %v1818 = vunpack.c.l.b16 %v1717
        %v1819 = vunpack.c.l.b16 %v1718
        %v1820 = vunpack.c.l.b16 %v1719
        %v1821 = vunpack.c.l.b16 %v1720
        %v1822 = vunpack.c.l.b16 %v1721
        %v1823 = vunpack.c.l.b16 %v1722
        %v1824 = vunpack.c.l.b16 %v1723
        %v1825 = vunpack.c.l.b16 %v1724
        %v1826 = vunpack.c.l.b16 %v1725
        %v1827 = vunpack.c.l.b16 %v1726
        %v1828 = vpack.c.b16 %v1813, %v1812
        %v1829 = vpack.c.b16 %v1815, %v1814
        %v1830 = vpack.c.b16 %v1817, %v1816
        %v1831 = vpack.c.b16 %v1819, %v1818
        %v1832 = vpack.c.b16 %v1821, %v1820
        %v1833 = vpack.c.b16 %v1823, %v1822
        %v1834 = vpack.c.b16 %v1825, %v1824
        %v1835 = vpack.c.b16 %v1827, %v1826
        %1844 = vmatprep.subr.bf16.mxu0 0
        %1845 = vmatpush1.bf16.msra.mxu0 %v1828
        %1846 = vmatprep.subr.bf16.mxu0 0
        %1847 = vmatpush1.bf16.msra.mxu0 %v1829
        %1848 = vmatprep.subr.bf16.mxu0 0
        %1849 = vmatpush1.bf16.msra.mxu0 %v1830
        %1850 = vmatprep.subr.bf16.mxu0 0
        %1851 = vmatpush1.bf16.msra.mxu0 %v1831
        %1852 = vmatprep.subr.bf16.mxu0 0
        %1853 = vmatpush1.bf16.msra.mxu0 %v1832
        %1854 = vmatprep.subr.bf16.mxu0 0
        %1855 = vmatpush1.bf16.msra.mxu0 %v1833
        %1856 = vmatprep.subr.bf16.mxu0 0
        %1857 = vmatpush1.bf16.msra.mxu0 %v1834
        %1858 = vmatprep.subr.bf16.mxu0 0
        %1859 = vmatpush1.bf16.msra.mxu0 %v1835
        %1860 = vmatprep.subr.bf16.mxu0 0
        %1861 = vmatpush1.bf16.msra.mxu0 0
        %1862 = vmatprep.subr.bf16.mxu0 0
        %1863 = vmatpush1.bf16.msra.mxu0 0
        %1864 = vmatprep.subr.bf16.mxu0 0
        %1865 = vmatpush1.bf16.msra.mxu0 0
        %1866 = vmatprep.subr.bf16.mxu0 0
        %1867 = vmatpush1.bf16.msra.mxu0 0
        %1868 = vmatprep.subr.bf16.mxu0 0
        %1869 = vmatpush1.bf16.msra.mxu0 0
        %1870 = vmatprep.subr.bf16.mxu0 0
        %1871 = vmatpush1.bf16.msra.mxu0 0
        %1872 = vmatprep.subr.bf16.mxu0 0
        %1873 = vmatpush1.bf16.msra.mxu0 0
        %1874 = vmatprep.subr.bf16.mxu0 0
        %1875 = vmatpush1.bf16.msra.mxu0 0
        %1876 = vmatprep.mubr.bf16.mxu0 0
        %1877 = vmatmul.mubr.bf16.gmra.mrb[0].mxu0 %v1763
        %v1878 = vpop.f32.mrb[0].mxu0
        %v1879 = vadd.f32 0.0, %v1878
        %v1880 = vpop.f32.mrb[0].mxu0
        %v1881 = vpop.f32.mrb[0].mxu0
        %v1882 = vadd.f32 0.0, %v1881
        %v1883 = vpop.f32.mrb[0].mxu0
        %1884 = vmatprep.mubr.bf16.mxu0 0
        %1885 = vmatmul.mubr.bf16.gmra.mrb[0].mxu0 %v1771
        %v1886 = vpop.f32.mrb[0].mxu0
        %v1887 = vadd.f32 0.0, %v1886
        %v1888 = vpop.f32.mrb[0].mxu0
        %v1889 = vpop.f32.mrb[0].mxu0
        %v1890 = vadd.f32 0.0, %v1889
        %v1891 = vpop.f32.mrb[0].mxu0
        %1892 = vmatprep.mubr.bf16.mxu0 0
        %1893 = vmatmul.mubr.bf16.gmra.mrb[0].mxu0 %v1779
        %v1894 = vpop.f32.mrb[0].mxu0
        %v1895 = vadd.f32 0.0, %v1894
        %v1896 = vpop.f32.mrb[0].mxu0
        %v1897 = vpop.f32.mrb[0].mxu0
        %v1898 = vadd.f32 0.0, %v1897
        %v1899 = vpop.f32.mrb[0].mxu0
        %1900 = vmatprep.mubr.bf16.mxu0 0
        %1901 = vmatmul.mubr.bf16.gmra.mrb[0].mxu0 %v1787
        %v1902 = vpop.f32.mrb[0].mxu0
        %v1903 = vadd.f32 0.0, %v1902
        %v1904 = vpop.f32.mrb[0].mxu0
        %v1905 = vpop.f32.mrb[0].mxu0
        %v1906 = vadd.f32 0.0, %v1905
        %v1907 = vpop.f32.mrb[0].mxu0
        %1908 = vmatprep.mubr.bf16.mxu0 0
        %1909 = vmatmul.mubr.bf16.gmra.mrb[0].mxu0 %v1790
        %v1910 = vpop.f32.mrb[0].mxu0
        %v1911 = vadd.f32 0.0, %v1910
        %v1912 = vpop.f32.mrb[0].mxu0
        %v1913 = vpop.f32.mrb[0].mxu0
        %v1914 = vpop.f32.mrb[0].mxu0
        %1915 = vdwg.mxu0
        %v1916 = vadd.f32 %v1691, %v1879
        %v1917 = vadd.f32 %v1692, %v1882
        %v1918 = vadd.f32 %v1693, %v1887
        %v1919 = vadd.f32 %v1694, %v1890
        %v1920 = vadd.f32 %v1695, %v1895
        %v1921 = vadd.f32 %v1696, %v1898
        %v1922 = vadd.f32 %v1697, %v1903
        %v1923 = vadd.f32 %v1698, %v1906
        %v1924 = vadd.f32 %v1699, %v1911
        %v1925 = vld [vmem:[%s294 + $0x4] sm:$0xe]
        %s1926 = scalar_lea.vmem %s4, 512
        %v1927 = vld [vmem:[%s1926] sm:$0xf]
        %v1928 = vld [vmem:[%s1926 + $0x4] sm:$0xf]
        %v1929 = vld [vmem:[%s1926 + $0x8] sm:$0xf]
        %v1930 = vld [vmem:[%s1926 + $0xc] sm:$0xf]
        %v1931 = vld [vmem:[%s1926 + $0x10] sm:$0xf]
        %v1932 = vld [vmem:[%s1926 + $0x14] sm:$0xf]
        %v1933 = vld [vmem:[%s1926 + $0x18] sm:$0xf]
        %v1934 = vld [vmem:[%s1926 + $0x1c] sm:$0xf]
        %v1935 = vld [vmem:[%s1926 + $0x20] sm:$0xf]
        %v1936 = vld [vmem:[%s1926 + $0x24] sm:$0xf]
        %v1937 = vld [vmem:[%s1926 + $0x28] sm:$0xf]
        %v1938 = vld [vmem:[%s1926 + $0x2c] sm:$0xf]
        %v1939 = vld [vmem:[%s1926 + $0x30] sm:$0xf]
        %v1940 = vld [vmem:[%s1926 + $0x34] sm:$0xf]
        %v1941 = vld [vmem:[%s1926 + $0x38] sm:$0xf]
        %v1942 = vld [vmem:[%s1926 + $0x3c] sm:$0xf]
        %v1944 = vunpack.c.l.b16 %v1925
        %v1945 = vpack.c.b16 %v1513, %v1944
        %vm1946 = vcmask 1046528
        %v1947 = vrot.slane %v1945, 1
        %v1948 = vrot.slane %v1523, 1
        %v1949 = vsel %vm1946, %v1947, %v1948
        %v1950 = vrot.slane %v1524, 1
        %v1951 = vsel %vm1946, %v1948, %v1950
        %v1952 = vrot.slane %v1525, 1
        %v1953 = vsel %vm1946, %v1950, %v1952
        %v1954 = vrot.slane %v1526, 1
        %v1955 = vsel %vm1946, %v1952, %v1954
        %v1977 = vunpack.c.l.b16 %v1927
        %v1978 = vunpack.c.l.b16 %v1928
        %v1979 = vunpack.c.l.b16 %v1929
        %v1980 = vunpack.c.l.b16 %v1930
        %v1981 = vunpack.c.l.b16 %v1931
        %v1982 = vunpack.c.l.b16 %v1932
        %v1983 = vunpack.c.l.b16 %v1933
        %v1984 = vunpack.c.l.b16 %v1934
        %v1985 = vunpack.c.l.b16 %v1935
        %v1986 = vunpack.c.l.b16 %v1936
        %v1987 = vunpack.c.l.b16 %v1937
        %v1988 = vunpack.c.l.b16 %v1938
        %v1989 = vunpack.c.l.b16 %v1939
        %v1990 = vunpack.c.l.b16 %v1940
        %v1991 = vunpack.c.l.b16 %v1941
        %v1992 = vunpack.c.l.b16 %v1942
        %v1993 = vpack.c.b16 %v1978, %v1977
        %v1994 = vpack.c.b16 %v1980, %v1979
        %v1995 = vpack.c.b16 %v1982, %v1981
        %v1996 = vpack.c.b16 %v1984, %v1983
        %v1997 = vpack.c.b16 %v1986, %v1985
        %v1998 = vpack.c.b16 %v1988, %v1987
        %v1999 = vpack.c.b16 %v1990, %v1989
        %v2000 = vpack.c.b16 %v1992, %v1991
        %2009 = vmatprep.subr.bf16.mxu0 0
        %2010 = vmatpush1.bf16.msra.mxu0 %v1993
        %2011 = vmatprep.subr.bf16.mxu0 0
        %2012 = vmatpush1.bf16.msra.mxu0 %v1994
        %2013 = vmatprep.subr.bf16.mxu0 0
        %2014 = vmatpush1.bf16.msra.mxu0 %v1995
        %2015 = vmatprep.subr.bf16.mxu0 0
        %2016 = vmatpush1.bf16.msra.mxu0 %v1996
        %2017 = vmatprep.subr.bf16.mxu0 0
        %2018 = vmatpush1.bf16.msra.mxu0 %v1997
        %2019 = vmatprep.subr.bf16.mxu0 0
        %2020 = vmatpush1.bf16.msra.mxu0 %v1998
        %2021 = vmatprep.subr.bf16.mxu0 0
        %2022 = vmatpush1.bf16.msra.mxu0 %v1999
        %2023 = vmatprep.subr.bf16.mxu0 0
        %2024 = vmatpush1.bf16.msra.mxu0 %v2000
        %2025 = vmatprep.subr.bf16.mxu0 0
        %2026 = vmatpush1.bf16.msra.mxu0 0
        %2027 = vmatprep.subr.bf16.mxu0 0
        %2028 = vmatpush1.bf16.msra.mxu0 0
        %2029 = vmatprep.subr.bf16.mxu0 0
        %2030 = vmatpush1.bf16.msra.mxu0 0
        %2031 = vmatprep.subr.bf16.mxu0 0
        %2032 = vmatpush1.bf16.msra.mxu0 0
        %2033 = vmatprep.subr.bf16.mxu0 0
        %2034 = vmatpush1.bf16.msra.mxu0 0
        %2035 = vmatprep.subr.bf16.mxu0 0
        %2036 = vmatpush1.bf16.msra.mxu0 0
        %2037 = vmatprep.subr.bf16.mxu0 0
        %2038 = vmatpush1.bf16.msra.mxu0 0
        %2039 = vmatprep.subr.bf16.mxu0 0
        %2040 = vmatpush1.bf16.msra.mxu0 0
        %2041 = vmatprep.mubr.bf16.mxu0 0
        %2042 = vmatmul.mubr.bf16.gmra.mrb[0].mxu0 %v1949
        %v2043 = vpop.f32.mrb[0].mxu0
        %v2044 = vadd.f32 0.0, %v2043
        %v2045 = vpop.f32.mrb[0].mxu0
        %v2046 = vpop.f32.mrb[0].mxu0
        %v2047 = vadd.f32 0.0, %v2046
        %v2048 = vpop.f32.mrb[0].mxu0
        %2049 = vmatprep.mubr.bf16.mxu0 0
        %2050 = vmatmul.mubr.bf16.gmra.mrb[0].mxu0 %v1951
        %v2051 = vpop.f32.mrb[0].mxu0
        %v2052 = vadd.f32 0.0, %v2051
        %v2053 = vpop.f32.mrb[0].mxu0
        %v2054 = vpop.f32.mrb[0].mxu0
        %v2055 = vadd.f32 0.0, %v2054
        %v2056 = vpop.f32.mrb[0].mxu0
        %2057 = vmatprep.mubr.bf16.mxu0 0
        %2058 = vmatmul.mubr.bf16.gmra.mrb[0].mxu0 %v1953
        %v2059 = vpop.f32.mrb[0].mxu0
        %v2060 = vadd.f32 0.0, %v2059
        %v2061 = vpop.f32.mrb[0].mxu0
        %v2062 = vpop.f32.mrb[0].mxu0
        %v2063 = vadd.f32 0.0, %v2062
        %v2064 = vpop.f32.mrb[0].mxu0
        %2065 = vmatprep.mubr.bf16.mxu0 0
        %2066 = vmatmul.mubr.bf16.gmra.mrb[0].mxu0 %v1955
        %v2067 = vpop.f32.mrb[0].mxu0
        %v2068 = vadd.f32 0.0, %v2067
        %v2069 = vpop.f32.mrb[0].mxu0
        %v2070 = vpop.f32.mrb[0].mxu0
        %v2071 = vadd.f32 0.0, %v2070
        %v2072 = vpop.f32.mrb[0].mxu0
        %2073 = vmatprep.mubr.bf16.mxu0 0
        %2074 = vmatmul.mubr.bf16.gmra.mrb[0].mxu0 %v1954
        %v2075 = vpop.f32.mrb[0].mxu0
        %v2076 = vadd.f32 0.0, %v2075
        %v2077 = vpop.f32.mrb[0].mxu0
        %v2078 = vpop.f32.mrb[0].mxu0
        %v2079 = vpop.f32.mrb[0].mxu0
        %2080 = vdwg.mxu0
        %v2081 = vadd.f32 %v1916, %v2044
        %v2082 = vadd.f32 %v1917, %v2047
        %v2083 = vadd.f32 %v1918, %v2052
        %v2084 = vadd.f32 %v1919, %v2055
        %v2085 = vadd.f32 %v1920, %v2060
        %v2086 = vadd.f32 %v1921, %v2063
        %v2087 = vadd.f32 %v1922, %v2068
        %v2088 = vadd.f32 %v1923, %v2071
        %v2089 = vadd.f32 %v1924, %v2076
        %v2090 = vld [vmem:[%s5] sm:$0x1]
        %v2092 = vlaneseq
        %v2093 = vshrl.u32 %v2092, 7
        %v2094 = vsub.s32 0, %v2093
        %v2095 = vrot.slane %v2090, %v2094
        %v2097 = vadd.f32 %v2081, %v2095
        %v2098 = vadd.f32 %v2082, %v2095
        %v2099 = vadd.f32 %v2083, %v2095
        %v2100 = vadd.f32 %v2084, %v2095
        %v2101 = vadd.f32 %v2085, %v2095
        %v2102 = vadd.f32 %v2086, %v2095
        %v2103 = vadd.f32 %v2087, %v2095
        %v2104 = vadd.f32 %v2088, %v2095
        %v2105 = vadd.f32 %v2089, %v2095
        %v2106 = vmax.f32 %v2097, 0.0
        %v2107 = vmax.f32 %v2098, 0.0
        %v2108 = vmax.f32 %v2099, 0.0
        %v2109 = vmax.f32 %v2100, 0.0
        %v2110 = vmax.f32 %v2101, 0.0
        %v2111 = vmax.f32 %v2102, 0.0
        %v2112 = vmax.f32 %v2103, 0.0
        %v2113 = vmax.f32 %v2104, 0.0
        %v2114 = vmax.f32 %v2105, 0.0
        %v2115 = vpack.c.bf16 %v2107, %v2106
        %v2116 = vpack.c.bf16 %v2109, %v2108
        %v2117 = vpack.c.bf16 %v2111, %v2110
        %v2118 = vpack.c.bf16 %v2113, %v2112
        %v2119 = vpack.c.bf16 %v2114, %v2114
        %v2125 = vunpack.c.l.b16 %v2115
        %v2126 = vunpack.c.h.b16 %v2115
        %v2127 = vunpack.c.l.b16 %v2116
        %v2128 = vunpack.c.h.b16 %v2116
        %v2129 = vunpack.c.l.b16 %v2117
        %v2130 = vunpack.c.h.b16 %v2117
        %v2131 = vunpack.c.l.b16 %v2118
        %v2132 = vunpack.c.h.b16 %v2118
        %v2133 = vunpack.c.l.b16 %v2119
        %v2134 = vpack.c.b16 %v2125, %v2125
        %v2135 = vpack.c.b16 %v2126, %v2126
        %v2136 = vpack.c.b16 %v2127, %v2127
        %v2137 = vpack.c.b16 %v2128, %v2128
        %v2138 = vpack.c.b16 %v2129, %v2129
        %v2139 = vpack.c.b16 %v2130, %v2130
        %v2140 = vpack.c.b16 %v2131, %v2131
        %v2141 = vpack.c.b16 %v2132, %v2132
        %v2142 = vpack.c.b16 %v2133, %v2133
        %2152 = vst [vmem:[%s289] sm:$0xf] %v2134
        %2153 = vst [vmem:[%s289 + $0x4] sm:$0xf] %v2135
        %2154 = vst [vmem:[%s289 + $0x8] sm:$0xf] %v2136
        %2155 = vst [vmem:[%s289 + $0xc] sm:$0xf] %v2137
        %2156 = vst [vmem:[%s289 + $0x10] sm:$0xf] %v2138
        %2157 = vst [vmem:[%s289 + $0x14] sm:$0xf] %v2139
        %2158 = vst [vmem:[%s289 + $0x18] sm:$0xf] %v2140
        %2159 = vst [vmem:[%s289 + $0x1c] sm:$0xf] %v2141
        %2160 = vst [vmem:[%s289 + $0x20] sm:$0xf] %v2142
        %s2161 = sand.u32 %s174, 1
        %s2162 = scalar_lea.sflag [#allocation3], %s2161
        %s2163 = sand.u32 %s174, 1
        %s2164 = smul.addr %s2163, 36
        %s2165 = scalar_lea.vmem [#allocation2], %s2164
        // Predicated region
        $region45: #{tpu_custom_call.1} parent=43 // pred_check
          %p2166 = pneg %p184
        $region46: #{tpu_custom_call.1} parent=43 // pred_check_branch
          %2168 = sbr.rel (%p2166) target = $region48
        $region47: #{tpu_custom_call.1} parent=43 // pred_region
          %s2170 = ssub.s32 576, 576
          %2171 = vsyncadd %s2162, %s2170
          %s2172 = smul.addr %s20, 9
          %s2173 = smul.addr %s2172, 64
          %s2174 = scalar_lea.hbm %s6, %s2173
          %s2175 = sshll.u32 %s2165, 4
          %s2176 = int_to_ptr.vmem [resolvable:$true] %s2175
          %2181 = dma.vmem_to_hbm [thread:$0]  %s2176, 576, %s2174, %s2162, 64, 64, 4
        $region48: #{tpu_custom_call.1} parent=43 // pred_fallthru
          _
      $region44: #{tpu_custom_call.1} parent=5 // pred_fallthru
        _
      %p2182 = scmp.le.s32.totalorder 2, %s15
      // Predicated region
      $region49: #{tpu_custom_call.1} parent=5 // pred_check
        %p2183 = pneg %p2182
      $region50: #{tpu_custom_call.1} parent=5 // pred_check_branch
        %2185 = sbr.rel (%p2183) target = $region52
      $region51: #{tpu_custom_call.1} parent=5 // pred_region
        %s2186 = ssub.s32 %s15, 2
        // Predicated region
        $region53: #{tpu_custom_call.1} parent=51 // pred_check
          %p2187 = pneg %p190
        $region54: #{tpu_custom_call.1} parent=51 // pred_check_branch
          %2189 = sbr.rel (%p2187) target = $region56
        $region55: #{tpu_custom_call.1} parent=51 // pred_region
          %s2190 = sand.u32 %s175, 1
          %s2191 = scalar_lea.sflag [#allocation3], %s2190
          %s2192 = sand.u32 %s175, 1
          %s2193 = smul.addr %s2192, 36
          %s2194 = scalar_lea.vmem [#allocation2], %s2193
          %2195 = dma.done %s2191, 576
        $region56: #{tpu_custom_call.1} parent=51 // pred_fallthru
          _
      $region52: #{tpu_custom_call.1} parent=5 // pred_fallthru
        _
    $region6: #{tpu_custom_call.1} parent=1 // loop_footer
      %s19 = sadd.s32 1, %s15
    $region7: #{tpu_custom_call.1} parent=1 // loop_footer_branch
      %14 = sbr.rel target = $region3
    $region8: #{tpu_custom_call.1} parent=1 // loop_exit
      _
    %2196 = vsyncpa [#allocation3], 1
    %s2197 = scalar_lea.sflag [#allocation3], 1
    %2198 = vsyncpa %s2197, 1

</llo_original>
